<compile_context>
chip_gen: v7x
topology: tpu7x:2x2x1
jax: 0.10.0
libtpu: 0.0.40
codegen_flags: <defaults>
</compile_context>

<pallas_src>
import functools

import jax
import jax.numpy as jnp
from jax import lax
from jax.experimental import pallas as pl
from jax.experimental.pallas import tpu as pltpu

EPS = 1e-5  # PyTorch BatchNorm1d default


def _round_up(x, m):
    return ((x + m - 1) // m) * m


def _fused_kernel(x_ref, w1_ref, gamma_ref, beta_ref, w2_ref, b2_ref, o_ref,
                  sum_ref, sq_ref, scale_ref, shift_ref, *, inv_n, mxu_dtype):
    """Two-phase fused forward.

    phase 0 : accumulate batch statistics of h = x @ W1 (bias dropped -- it cancels under
              batch-mean subtraction); on the last tile compute scale/shift.
    phase 1 : recompute h, apply BN (scale/shift) + ReLU, classify into the lane-padded
              output tile.
    """
    phase = pl.program_id(0)
    i = pl.program_id(1)
    last = pl.num_programs(1) - 1

    a = x_ref[...]
    w1 = w1_ref[...]
    if mxu_dtype is not None:
        a = a.astype(mxu_dtype)
        w1 = w1.astype(mxu_dtype)
    h = jnp.dot(a, w1, preferred_element_type=jnp.float32)  # (tile_n, F_HID) f32

    @pl.when(phase == 0)
    def _():
        @pl.when(i == 0)
        def _():
            sum_ref[...] = jnp.zeros_like(sum_ref)
            sq_ref[...] = jnp.zeros_like(sq_ref)

        sum_ref[...] += jnp.sum(h, axis=0, keepdims=True)        # (1, F_HID)
        sq_ref[...] += jnp.sum(h * h, axis=0, keepdims=True)     # (1, F_HID)

        @pl.when(i == last)
        def _():
            mean = sum_ref[...] * inv_n                           # divide by the REAL n
            var = jnp.maximum(sq_ref[...] * inv_n - mean * mean, 0.0)  # biased (PyTorch fwd)
            scale = gamma_ref[...] * lax.rsqrt(var + EPS)
            scale_ref[...] = scale
            shift_ref[...] = beta_ref[...] - mean * scale

        # Output block is revisited in phase 1; write defined zeros for the phase-0 writeback.
        o_ref[...] = jnp.zeros_like(o_ref)

    @pl.when(phase == 1)
    def _():
        act = jnp.maximum(h * scale_ref[...] + shift_ref[...], 0.0)
        w2 = w2_ref[...]
        if mxu_dtype is not None:
            act = act.astype(mxu_dtype)
            w2 = w2.astype(mxu_dtype)
        out = jnp.dot(act, w2, preferred_element_type=jnp.float32)
        o_ref[...] = (out + b2_ref[...]).astype(o_ref.dtype)


def linear_projection(x, w1, b1, gamma, beta, w2, b2, *, tile_n=256, mxu_dtype=None):
    """Forward pass of Linear_projection with training-mode BatchNorm batch statistics.

    b1 is accepted for interface parity with nn.Linear but is mathematically a no-op:
    BatchNorm subtracts the batch mean, which cancels any constant per-feature bias.
    """
    del b1  # exactly cancelled by training-mode BN mean subtraction
    n, f_in = x.shape
    f_hid = w1.shape[1]
    f_out = w2.shape[1]
    out_dtype = x.dtype

    # ---- batch tiling: pad N to a multiple of the row tile (>= 8).  Padded zero rows give
    #      h == 0 exactly (no bias), so the statistics stay correct as long as we divide by
    #      the real n inside the kernel. ----
    tile_n = int(min(tile_n, _round_up(n, 8)))
    n_pad = _round_up(n, tile_n)
    if n_pad != n:
        x = jnp.pad(x, ((0, n_pad - n), (0, 0)))
    num_tiles = n_pad // tile_n

    # ---- lane-pad the 2-wide classifier to a multiple of 128 so the output store is
    #      lane-dense and the MXU result tile is not degenerate ----
    f_out_p = _round_up(f_out, 128)
    w2_p = jnp.pad(w2, ((0, 0), (0, f_out_p - f_out)))
    b2_p = jnp.pad(b2.reshape(1, f_out), ((0, 0), (0, f_out_p - f_out)))
    gamma = gamma.reshape(1, f_hid)
    beta = beta.reshape(1, f_hid)

    out_p = pl.pallas_call(
        functools.partial(_fused_kernel, inv_n=1.0 / float(n), mxu_dtype=mxu_dtype),
        grid=(2, num_tiles),
        in_specs=[
            pl.BlockSpec((tile_n, f_in), lambda p, i: (i, 0)),    # x row tile
            pl.BlockSpec((f_in, f_hid), lambda p, i: (0, 0)),     # W1 (grid-invariant)
            pl.BlockSpec((1, f_hid), lambda p, i: (0, 0)),        # gamma
            pl.BlockSpec((1, f_hid), lambda p, i: (0, 0)),        # beta
            pl.BlockSpec((f_hid, f_out_p), lambda p, i: (0, 0)),  # W2 (lane-padded)
            pl.BlockSpec((1, f_out_p), lambda p, i: (0, 0)),      # b2 (lane-padded)
        ],
        out_specs=pl.BlockSpec((tile_n, f_out_p), lambda p, i: (i, 0)),
        out_shape=jax.ShapeDtypeStruct((n_pad, f_out_p), out_dtype),
        scratch_shapes=[
            pltpu.VMEM((1, f_hid), jnp.float32),  # batch sum
            pltpu.VMEM((1, f_hid), jnp.float32),  # batch sum of squares
            pltpu.VMEM((1, f_hid), jnp.float32),  # folded scale = gamma * rsqrt(var+eps)
            pltpu.VMEM((1, f_hid), jnp.float32),  # folded shift = beta - mean*scale
        ],
        compiler_params=pltpu.CompilerParams(
            dimension_semantics=("arbitrary", "arbitrary")),
    )(x, w1, gamma, beta, w2_p, b2_p)

    return out_p[:n, :f_out]


def reference(x, w1, b1, gamma, beta, w2, b2):
    h = x @ w1 + b1
    mean = jnp.mean(h, axis=0, keepdims=True)
    var = jnp.mean((h - mean) ** 2, axis=0, keepdims=True)
    h = (h - mean) * lax.rsqrt(var + EPS) * gamma.reshape(1, -1) + beta.reshape(1, -1)
    h = jnp.maximum(h, 0.0)
    return h @ w2 + b2.reshape(1, -1)


if __name__ == "__main__":
    key = jax.random.PRNGKey(0)
    k_x, k_w1, k_b1, k_w2, k_b2 = jax.random.split(key, 5)

    # Feature dims fixed by the module; N chosen non-multiple of the tile to exercise the
    # batch padding + multi-tile path while staying small.
    N, F_IN, F_HID, F_OUT = 200, 512, 512, 2

    bound1 = 1.0 / jnp.sqrt(F_IN)
    bound2 = 1.0 / jnp.sqrt(F_HID)
    w1 = jax.random.uniform(k_w1, (F_IN, F_HID), jnp.float32, -bound1, bound1)
    b1 = jax.random.uniform(k_b1, (1, F_HID), jnp.float32, -bound1, bound1)
    gamma = jnp.ones((1, F_HID), jnp.float32)   # BatchNorm1d default weight
    beta = jnp.zeros((1, F_HID), jnp.float32)   # BatchNorm1d default bias
    w2 = jax.random.uniform(k_w2, (F_HID, F_OUT), jnp.float32, -bound2, bound2)
    b2 = jax.random.uniform(k_b2, (1, F_OUT), jnp.float32, -bound2, bound2)

    x = jax.random.normal(k_x, (N, F_IN), jnp.float32)

    out = linear_projection(x, w1, b1, gamma, beta, w2, b2, tile_n=128)
    out = jax.block_until_ready(out)

    ref = reference(x, w1, b1, gamma, beta, w2, b2)
    assert out.shape == (N, F_OUT)
    assert jnp.allclose(out, ref, atol=1e-4, rtol=1e-4), float(jnp.max(jnp.abs(out - ref)))

    print("KERNEL_OK")
</pallas_src>

<mosaic_0001>
module attributes {stable_mosaic.version = 11 : i64} {
  func.func @_fused_kernel(%arg0: i32, %arg1: i32, %arg2: memref<128x512xf32, #tpu.memory_space<vmem>>, %arg3: memref<512x512xf32, #tpu.memory_space<vmem>>, %arg4: memref<1x512xf32, #tpu.memory_space<vmem>>, %arg5: memref<1x512xf32, #tpu.memory_space<vmem>>, %arg6: memref<512x128xf32, #tpu.memory_space<vmem>>, %arg7: memref<1x128xf32, #tpu.memory_space<vmem>>, %arg8: memref<128x128xf32, #tpu.memory_space<vmem>>, %arg9: memref<1x512xf32, #tpu.memory_space<vmem>>, %arg10: memref<1x512xf32, #tpu.memory_space<vmem>>, %arg11: memref<1x512xf32, #tpu.memory_space<vmem>>, %arg12: memref<1x512xf32, #tpu.memory_space<vmem>>) attributes {dimension_semantics = [#tpu.dimension_semantics<arbitrary>, #tpu.dimension_semantics<arbitrary>], iteration_bounds = array<i64: 2, 2>, scalar_prefetch = 0 : i64, scratch_operands = 4 : i64, tpu.core_type = #tpu.core_type<tc>, window_params = [{transform_indices = @transform_0, window_bounds = array<i64: 128, 512>}, {pipeline_mode = #tpu.pipeline_mode<synchronous>, transform_indices = @transform_1, window_bounds = array<i64: 512, 512>}, {pipeline_mode = #tpu.pipeline_mode<synchronous>, transform_indices = @transform_2, window_bounds = array<i64: 1, 512>}, {pipeline_mode = #tpu.pipeline_mode<synchronous>, transform_indices = @transform_3, window_bounds = array<i64: 1, 512>}, {pipeline_mode = #tpu.pipeline_mode<synchronous>, transform_indices = @transform_4, window_bounds = array<i64: 512, 128>}, {pipeline_mode = #tpu.pipeline_mode<synchronous>, transform_indices = @transform_5, window_bounds = array<i64: 1, 128>}, {transform_indices = @transform_6, window_bounds = array<i64: 128, 128>}]} {
    %c0 = arith.constant 0 : index
    %c0_0 = arith.constant 0 : index
    %0 = vector.load %arg2[%c0, %c0_0] : memref<128x512xf32, #tpu.memory_space<vmem>>, vector<128x512xf32>
    %c0_1 = arith.constant 0 : index
    %c0_2 = arith.constant 0 : index
    %1 = vector.load %arg3[%c0_1, %c0_2] : memref<512x512xf32, #tpu.memory_space<vmem>>, vector<512x512xf32>
    %cst = arith.constant dense<0.000000e+00> : vector<128x512xf32>
    %2 = tpu.matmul %0, %1, %cst {dimension_numbers = #tpu.dot_dimension_numbers<[1], [0], [0], [1], [0, 0, 1, 1], [], []>} : vector<128x512xf32>, vector<512x512xf32>, vector<128x512xf32> -> vector<128x512xf32>
    %c0_i32 = arith.constant 0 : i32
    %3 = arith.cmpi eq, %arg0, %c0_i32 : i32
    %4 = arith.extui %3 : i1 to i32
    %c0_i32_3 = arith.constant 0 : i32
    %5 = arith.cmpi ne, %4, %c0_i32_3 : i32
    scf.if %5 {
      %c0_i32_5 = arith.constant 0 : i32
      %9 = arith.cmpi eq, %arg1, %c0_i32_5 : i32
      %10 = arith.extui %9 : i1 to i32
      %c0_i32_6 = arith.constant 0 : i32
      %11 = arith.cmpi ne, %10, %c0_i32_6 : i32
      scf.if %11 {
        %cst_22 = arith.constant 0.000000e+00 : f32
        %28 = vector.broadcast %cst_22 : f32 to vector<1x512xf32>
        %c0_23 = arith.constant 0 : index
        %c0_24 = arith.constant 0 : index
        %29 = vector.load %arg9[%c0_23, %c0_24] : memref<1x512xf32, #tpu.memory_space<vmem>>, vector<1x512xf32>
        tpu.vector_store %arg9[%c0_23, %c0_24], %28 {strides = array<i32>} : memref<1x512xf32, #tpu.memory_space<vmem>>, vector<1x512xf32>,
        %cst_25 = arith.constant 0.000000e+00 : f32
        %30 = vector.broadcast %cst_25 : f32 to vector<1x512xf32>
        %c0_26 = arith.constant 0 : index
        %c0_27 = arith.constant 0 : index
        %31 = vector.load %arg10[%c0_26, %c0_27] : memref<1x512xf32, #tpu.memory_space<vmem>>, vector<1x512xf32>
        tpu.vector_store %arg10[%c0_26, %c0_27], %30 {strides = array<i32>} : memref<1x512xf32, #tpu.memory_space<vmem>>, vector<1x512xf32>,
      } else {
      }
      %c0_7 = arith.constant 0 : index
      %c0_8 = arith.constant 0 : index
      %12 = vector.load %arg9[%c0_7, %c0_8] : memref<1x512xf32, #tpu.memory_space<vmem>>, vector<1x512xf32>
      %cst_9 = arith.constant dense<0.000000e+00> : vector<512xf32>
      %13 = vector.multi_reduction <add>, %2, %cst_9 [0] : vector<128x512xf32> to vector<512xf32>
      %14 = vector.shape_cast %13 : vector<512xf32> to vector<1x512xf32>
      %15 = arith.addf %12, %14 : vector<1x512xf32>
      %c0_10 = arith.constant 0 : index
      %c0_11 = arith.constant 0 : index
      %16 = vector.load %arg9[%c0_10, %c0_11] : memref<1x512xf32, #tpu.memory_space<vmem>>, vector<1x512xf32>
      tpu.vector_store %arg9[%c0_10, %c0_11], %15 {strides = array<i32>} : memref<1x512xf32, #tpu.memory_space<vmem>>, vector<1x512xf32>,
      %c0_12 = arith.constant 0 : index
      %c0_13 = arith.constant 0 : index
      %17 = vector.load %arg10[%c0_12, %c0_13] : memref<1x512xf32, #tpu.memory_space<vmem>>, vector<1x512xf32>
      %18 = arith.mulf %2, %2 : vector<128x512xf32>
      %cst_14 = arith.constant dense<0.000000e+00> : vector<512xf32>
      %19 = vector.multi_reduction <add>, %18, %cst_14 [0] : vector<128x512xf32> to vector<512xf32>
      %20 = vector.shape_cast %19 : vector<512xf32> to vector<1x512xf32>
      %21 = arith.addf %17, %20 : vector<1x512xf32>
      %c0_15 = arith.constant 0 : index
      %c0_16 = arith.constant 0 : index
      %22 = vector.load %arg10[%c0_15, %c0_16] : memref<1x512xf32, #tpu.memory_space<vmem>>, vector<1x512xf32>
      tpu.vector_store %arg10[%c0_15, %c0_16], %21 {strides = array<i32>} : memref<1x512xf32, #tpu.memory_space<vmem>>, vector<1x512xf32>,
      %c1_i32_17 = arith.constant 1 : i32
      %23 = arith.cmpi eq, %arg1, %c1_i32_17 : i32
      %24 = arith.extui %23 : i1 to i32
      %c0_i32_18 = arith.constant 0 : i32
      %25 = arith.cmpi ne, %24, %c0_i32_18 : i32
      scf.if %25 {
        %c0_22 = arith.constant 0 : index
        %c0_23 = arith.constant 0 : index
        %28 = vector.load %arg9[%c0_22, %c0_23] : memref<1x512xf32, #tpu.memory_space<vmem>>, vector<1x512xf32>
        %cst_24 = arith.constant 5.000000e-03 : f32
        %29 = vector.broadcast %cst_24 : f32 to vector<1x512xf32>
        %30 = arith.mulf %28, %29 : vector<1x512xf32>
        %c0_25 = arith.constant 0 : index
        %c0_26 = arith.constant 0 : index
        %31 = vector.load %arg10[%c0_25, %c0_26] : memref<1x512xf32, #tpu.memory_space<vmem>>, vector<1x512xf32>
        %cst_27 = arith.constant 5.000000e-03 : f32
        %32 = vector.broadcast %cst_27 : f32 to vector<1x512xf32>
        %33 = arith.mulf %31, %32 : vector<1x512xf32>
        %34 = arith.mulf %30, %30 : vector<1x512xf32>
        %35 = arith.subf %33, %34 : vector<1x512xf32>
        %cst_28 = arith.constant 0.000000e+00 : f32
        %36 = vector.broadcast %cst_28 : f32 to vector<1x512xf32>
        %37 = arith.maximumf %35, %36 : vector<1x512xf32>
        %c0_29 = arith.constant 0 : index
        %c0_30 = arith.constant 0 : index
        %38 = vector.load %arg4[%c0_29, %c0_30] : memref<1x512xf32, #tpu.memory_space<vmem>>, vector<1x512xf32>
        %cst_31 = arith.constant 9.99999974E-6 : f32
        %39 = vector.broadcast %cst_31 : f32 to vector<1x512xf32>
        %40 = arith.addf %37, %39 : vector<1x512xf32>
        %41 = math.rsqrt %40 : vector<1x512xf32>
        %42 = arith.mulf %38, %41 : vector<1x512xf32>
        %c0_32 = arith.constant 0 : index
        %c0_33 = arith.constant 0 : index
        %43 = vector.load %arg11[%c0_32, %c0_33] : memref<1x512xf32, #tpu.memory_space<vmem>>, vector<1x512xf32>
        tpu.vector_store %arg11[%c0_32, %c0_33], %42 {strides = array<i32>} : memref<1x512xf32, #tpu.memory_space<vmem>>, vector<1x512xf32>,
        %c0_34 = arith.constant 0 : index
        %c0_35 = arith.constant 0 : index
        %44 = vector.load %arg5[%c0_34, %c0_35] : memref<1x512xf32, #tpu.memory_space<vmem>>, vector<1x512xf32>
        %45 = arith.mulf %30, %42 : vector<1x512xf32>
        %46 = arith.subf %44, %45 : vector<1x512xf32>
        %c0_36 = arith.constant 0 : index
        %c0_37 = arith.constant 0 : index
        %47 = vector.load %arg12[%c0_36, %c0_37] : memref<1x512xf32, #tpu.memory_space<vmem>>, vector<1x512xf32>
        tpu.vector_store %arg12[%c0_36, %c0_37], %46 {strides = array<i32>} : memref<1x512xf32, #tpu.memory_space<vmem>>, vector<1x512xf32>,
      } else {
      }
      %cst_19 = arith.constant 0.000000e+00 : f32
      %26 = vector.broadcast %cst_19 : f32 to vector<128x128xf32>
      %c0_20 = arith.constant 0 : index
      %c0_21 = arith.constant 0 : index
      %27 = vector.load %arg8[%c0_20, %c0_21] : memref<128x128xf32, #tpu.memory_space<vmem>>, vector<128x128xf32>
      tpu.vector_store %arg8[%c0_20, %c0_21], %26 {strides = array<i32>} : memref<128x128xf32, #tpu.memory_space<vmem>>, vector<128x128xf32>,
    } else {
    }
    %c1_i32 = arith.constant 1 : i32
    %6 = arith.cmpi eq, %arg0, %c1_i32 : i32
    %7 = arith.extui %6 : i1 to i32
    %c0_i32_4 = arith.constant 0 : i32
    %8 = arith.cmpi ne, %7, %c0_i32_4 : i32
    scf.if %8 {
      %c0_5 = arith.constant 0 : index
      %c0_6 = arith.constant 0 : index
      %9 = vector.load %arg11[%c0_5, %c0_6] : memref<1x512xf32, #tpu.memory_space<vmem>>, vector<1x512xf32>
      %10 = vector.broadcast %9 : vector<1x512xf32> to vector<128x512xf32>
      %11 = arith.mulf %2, %10 : vector<128x512xf32>
      %c0_7 = arith.constant 0 : index
      %c0_8 = arith.constant 0 : index
      %12 = vector.load %arg12[%c0_7, %c0_8] : memref<1x512xf32, #tpu.memory_space<vmem>>, vector<1x512xf32>
      %13 = vector.broadcast %12 : vector<1x512xf32> to vector<128x512xf32>
      %14 = arith.addf %11, %13 : vector<128x512xf32>
      %cst_9 = arith.constant 0.000000e+00 : f32
      %15 = vector.broadcast %cst_9 : f32 to vector<128x512xf32>
      %16 = arith.maximumf %14, %15 : vector<128x512xf32>
      %c0_10 = arith.constant 0 : index
      %c0_11 = arith.constant 0 : index
      %17 = vector.load %arg6[%c0_10, %c0_11] : memref<512x128xf32, #tpu.memory_space<vmem>>, vector<512x128xf32>
      %cst_12 = arith.constant dense<0.000000e+00> : vector<128x128xf32>
      %18 = tpu.matmul %16, %17, %cst_12 {dimension_numbers = #tpu.dot_dimension_numbers<[1], [0], [0], [1], [0, 0, 1, 1], [], []>} : vector<128x512xf32>, vector<512x128xf32>, vector<128x128xf32> -> vector<128x128xf32>
      %c0_13 = arith.constant 0 : index
      %c0_14 = arith.constant 0 : index
      %19 = vector.load %arg7[%c0_13, %c0_14] : memref<1x128xf32, #tpu.memory_space<vmem>>, vector<1x128xf32>
      %20 = vector.broadcast %19 : vector<1x128xf32> to vector<128x128xf32>
      %21 = arith.addf %18, %20 : vector<128x128xf32>
      %c0_15 = arith.constant 0 : index
      %c0_16 = arith.constant 0 : index
      %22 = vector.load %arg8[%c0_15, %c0_16] : memref<128x128xf32, #tpu.memory_space<vmem>>, vector<128x128xf32>
      tpu.vector_store %arg8[%c0_15, %c0_16], %21 {strides = array<i32>} : memref<128x128xf32, #tpu.memory_space<vmem>>, vector<128x128xf32>,
    } else {
    }
    return
  }
  func.func @transform_0(%arg0: i32, %arg1: i32) -> (i32, i32) {
    %c0_i32 = arith.constant 0 : i32
    %c0_i32_0 = arith.constant 0 : i32
    return %arg1, %c0_i32 : i32, i32
  }
  func.func @transform_1(%arg0: i32, %arg1: i32) -> (i32, i32) {
    %c0_i32 = arith.constant 0 : i32
    %c0_i32_0 = arith.constant 0 : i32
    %c0_i32_1 = arith.constant 0 : i32
    return %c0_i32, %c0_i32_0 : i32, i32
  }
  func.func @transform_2(%arg0: i32, %arg1: i32) -> (i32, i32) {
    %c0_i32 = arith.constant 0 : i32
    %c0_i32_0 = arith.constant 0 : i32
    %c0_i32_1 = arith.constant 0 : i32
    return %c0_i32, %c0_i32_0 : i32, i32
  }
  func.func @transform_3(%arg0: i32, %arg1: i32) -> (i32, i32) {
    %c0_i32 = arith.constant 0 : i32
    %c0_i32_0 = arith.constant 0 : i32
    %c0_i32_1 = arith.constant 0 : i32
    return %c0_i32, %c0_i32_0 : i32, i32
  }
  func.func @transform_4(%arg0: i32, %arg1: i32) -> (i32, i32) {
    %c0_i32 = arith.constant 0 : i32
    %c0_i32_0 = arith.constant 0 : i32
    %c0_i32_1 = arith.constant 0 : i32
    return %c0_i32, %c0_i32_0 : i32, i32
  }
  func.func @transform_5(%arg0: i32, %arg1: i32) -> (i32, i32) {
    %c0_i32 = arith.constant 0 : i32
    %c0_i32_0 = arith.constant 0 : i32
    %c0_i32_1 = arith.constant 0 : i32
    return %c0_i32, %c0_i32_0 : i32, i32
  }
  func.func @transform_6(%arg0: i32, %arg1: i32) -> (i32, i32) {
    %c0_i32 = arith.constant 0 : i32
    %c0_i32_0 = arith.constant 0 : i32
    return %arg1, %c0_i32 : i32, i32
  }
}

</mosaic_0001>

<llo_original>
// kernel: tpu_custom_call.1
$region0: #{tpu_custom_call.1}
  #allocation0 [shape = 'u32[]', space=smem, size = 0x4, offset = 0x4, fixed_abs, tag = 'smem constant byte address 0x4 - core index']
  #allocation1 [shape = 'u32[144,128]{1,0:T(1,128)}', space=vmem, size = 0x12000, scoped, tag = 'internal scratch']
  #allocation2 [shape = 'f32[1,512]{1,0:T(1,128)}', space=vmem, size = 0x800, scoped, tag = 'scratch operand']
  #allocation3 [shape = 'f32[1,512]{1,0:T(1,128)}', space=vmem, size = 0x800, scoped, tag = 'scratch operand']
  #allocation4 [shape = 'f32[1,512]{1,0:T(1,128)}', space=vmem, size = 0x800, scoped, tag = 'scratch operand']
  #allocation5 [shape = 'f32[1,512]{1,0:T(1,128)}', space=vmem, size = 0x800, scoped, tag = 'scratch operand']
  %s0 = inlined_call_operand.hbm [shape: f32[256,512], index: 0, kind: input, shape index: {}]
  %s1 = inlined_call_operand.hbm [shape: f32[512,512], index: 1, kind: input, shape index: {}]
  %s2 = inlined_call_operand.vmem [shape: f32[1,512], index: 2, kind: input, shape index: {}]
  %s3 = inlined_call_operand.vmem [shape: f32[1,512], index: 3, kind: input, shape index: {}]
  %s4 = inlined_call_operand.hbm [shape: f32[512,128], index: 4, kind: input, shape index: {}]
  %s5 = inlined_call_operand.vmem [shape: f32[1,128], index: 5, kind: input, shape index: {}]
  %s6 = inlined_call_operand.hbm [shape: f32[256,128], index: 6, kind: output, shape index: {}]
  %s7 = sld [smem:[#allocation0]]
  $region85: #{tpu_custom_call.1} parent=0
    _
  %s9 = ssub.s32 1, %s7
  %s10 = scalar_select 0, %s9, %s7
  $region1: #{tpu_custom_call.1} parent=0
    #allocation6 [shape = 'u8[524288]{0}', space=vmem, size = 0x80000, scoped, tag = 'input window, operand 0']
    #allocation7 [shape = 's32[2]{0}', space=sflag, size = 0x8, scoped, tag = 'scoped memory for tpu_custom_call.1']
    #allocation8 [shape = 's32[2]{0}', space=sflag, size = 0x8, scoped, tag = 'scoped memory for tpu_custom_call.1']
    #allocation9 [shape = 'u8[1048576]{0}', space=vmem, size = 0x100000, scoped, tag = 'input window, operand 1, single buffered']
    #allocation10 [shape = 's32[1]{0}', space=sflag, size = 0x4, scoped, tag = 'scoped memory for tpu_custom_call.1']
    #allocation11 [shape = 'u8[262144]{0}', space=vmem, size = 0x40000, scoped, tag = 'input window, operand 4, single buffered']
    #allocation12 [shape = 'u8[131072]{0}', space=vmem, size = 0x20000, scoped, tag = 'output window, operand 0']
    %11 = vsyncpa [#allocation7], 0
    %s12 = scalar_lea.sflag [#allocation7], 1
    %13 = vsyncpa %s12, 0
    %14 = vsyncpa [#allocation10], 0
    %15 = vsyncpa [#allocation8], 0
    %s16 = scalar_lea.sflag [#allocation8], 1
    %17 = vsyncpa %s16, 0
    loop: start=0, step=1, limit=6
    $region2: #{tpu_custom_call.1} parent=1 // loop_pre_header
      _
    $region3: #{tpu_custom_call.1} parent=1 // loop_header
      %s19 = sphi 0, %s23
      %p20 = scmp.ge.s32.totalorder %s19, 6
      %s26 = sphi 0, %s38
      %s27 = sphi 0, %s34
      %s28 = sphi 0, %s26
      %s29 = sphi 0, %s27
      %s30 = sphi 0, %s28
      %s31 = sphi 0, %s29
      %s41 = sphi 0, %s43
      %s44 = sphi 0, %s41
      %s45 = sphi 0, %s44
      %s61 = sphi 0, %s45
      %s65 = sphi 0, %s65
      %s67 = sphi 0, %s65
      %s68 = sphi 0, %s67
      %s82 = sphi 0, %s68
      %s86 = sphi 0, %s86
      %s88 = sphi 0, %s86
      %s89 = sphi 0, %s88
      %s103 = sphi 0, %s89
      %s107 = sphi 0, %s107
      %s109 = sphi 0, %s107
      %s110 = sphi 0, %s109
      %s124 = sphi 0, %s110
      %s128 = sphi 0, %s128
      %s130 = sphi 0, %s128
      %s131 = sphi 0, %s130
      %s145 = sphi 0, %s131
      %s149 = sphi 0, %s149
      %s151 = sphi 0, %s149
      %s152 = sphi 0, %s151
      %s166 = sphi 0, %s152
      %s172 = sphi 0, %s174
      %s175 = sphi 0, %s172
      %s176 = sphi 0, %s175
      %s192 = sphi 0, %s176
    $region4: #{tpu_custom_call.1} parent=1 // loop_header_branch
      %22 = sbr.rel (%p20) target = $region8
    $region5: #{tpu_custom_call.1} parent=1 // loop_body
      %s24 = ssub.s32 %s19, 1
      %s25 = ssub.s32 %s19, 2
      %s32 = sadd.s32 1, %s27
      %p33 = scmp.ge.s32.totalorder %s32, 2
      %s34 = scalar_select %p33, 0, %s32
      %s35 = sadd.s32 1, %s26
      %s36 = scalar_select %p33, %s35, %s26
      %p37 = scmp.ge.s32.totalorder %s36, 2
      %s38 = scalar_select %p37, 0, %s36
      %s39 = ssub.s32 %s27, %s34
      %p40 = scmp.eq.s32.totalorder %s39, 0
      %s42 = sadd.s32 %s41, 1
      %s43 = scalar_select %p40, %s41, %s42
      %p46 = pneg %p40
      %p47 = scmp.eq.s32.totalorder %s19, 3
      %p48 = por %p46, %p47
      %p49 = scmp.ne.s32.totalorder %s41, %s44
      %p50 = scmp.eq.s32.totalorder %s19, 0
      %p51 = por %p49, %p50
      %p52 = scmp.ne.s32.totalorder %s41, %s44
      %p53 = scmp.eq.s32.totalorder %s24, 3
      %p54 = por %p52, %p53
      %p55 = scmp.ne.s32.totalorder %s44, %s45
      %p56 = scmp.eq.s32.totalorder %s24, 0
      %p57 = por %p55, %p56
      %p58 = scmp.ne.s32.totalorder %s44, %s45
      %p59 = scmp.eq.s32.totalorder %s25, 3
      %p60 = por %p58, %p59
      %p62 = scmp.ne.s32.totalorder %s45, %s61
      %p63 = scmp.eq.s32.totalorder %s25, 0
      %p64 = por %p62, %p63
      %s66 = sadd.s32 %s65, 1
      %p69 = scmp.eq.s32.totalorder %s19, 3
      %p70 = scmp.ne.s32.totalorder %s65, %s67
      %p71 = scmp.eq.s32.totalorder %s19, 0
      %p72 = por %p70, %p71
      %p73 = scmp.ne.s32.totalorder %s65, %s67
      %p74 = scmp.eq.s32.totalorder %s24, 3
      %p75 = por %p73, %p74
      %p76 = scmp.ne.s32.totalorder %s67, %s68
      %p77 = scmp.eq.s32.totalorder %s24, 0
      %p78 = por %p76, %p77
      %p79 = scmp.ne.s32.totalorder %s67, %s68
      %p80 = scmp.eq.s32.totalorder %s25, 3
      %p81 = por %p79, %p80
      %p83 = scmp.ne.s32.totalorder %s68, %s82
      %p84 = scmp.eq.s32.totalorder %s25, 0
      %p85 = por %p83, %p84
      %s87 = sadd.s32 %s86, 1
      %p90 = scmp.eq.s32.totalorder %s19, 3
      %p91 = scmp.ne.s32.totalorder %s86, %s88
      %p92 = scmp.eq.s32.totalorder %s19, 0
      %p93 = por %p91, %p92
      %p94 = scmp.ne.s32.totalorder %s86, %s88
      %p95 = scmp.eq.s32.totalorder %s24, 3
      %p96 = por %p94, %p95
      %p97 = scmp.ne.s32.totalorder %s88, %s89
      %p98 = scmp.eq.s32.totalorder %s24, 0
      %p99 = por %p97, %p98
      %p100 = scmp.ne.s32.totalorder %s88, %s89
      %p101 = scmp.eq.s32.totalorder %s25, 3
      %p102 = por %p100, %p101
      %p104 = scmp.ne.s32.totalorder %s89, %s103
      %p105 = scmp.eq.s32.totalorder %s25, 0
      %p106 = por %p104, %p105
      %s108 = sadd.s32 %s107, 1
      %p111 = scmp.eq.s32.totalorder %s19, 3
      %p112 = scmp.ne.s32.totalorder %s107, %s109
      %p113 = scmp.eq.s32.totalorder %s19, 0
      %p114 = por %p112, %p113
      %p115 = scmp.ne.s32.totalorder %s107, %s109
      %p116 = scmp.eq.s32.totalorder %s24, 3
      %p117 = por %p115, %p116
      %p118 = scmp.ne.s32.totalorder %s109, %s110
      %p119 = scmp.eq.s32.totalorder %s24, 0
      %p120 = por %p118, %p119
      %p121 = scmp.ne.s32.totalorder %s109, %s110
      %p122 = scmp.eq.s32.totalorder %s25, 3
      %p123 = por %p121, %p122
      %p125 = scmp.ne.s32.totalorder %s110, %s124
      %p126 = scmp.eq.s32.totalorder %s25, 0
      %p127 = por %p125, %p126
      %s129 = sadd.s32 %s128, 1
      %p132 = scmp.eq.s32.totalorder %s19, 3
      %p133 = scmp.ne.s32.totalorder %s128, %s130
      %p134 = scmp.eq.s32.totalorder %s19, 0
      %p135 = por %p133, %p134
      %p136 = scmp.ne.s32.totalorder %s128, %s130
      %p137 = scmp.eq.s32.totalorder %s24, 3
      %p138 = por %p136, %p137
      %p139 = scmp.ne.s32.totalorder %s130, %s131
      %p140 = scmp.eq.s32.totalorder %s24, 0
      %p141 = por %p139, %p140
      %p142 = scmp.ne.s32.totalorder %s130, %s131
      %p143 = scmp.eq.s32.totalorder %s25, 3
      %p144 = por %p142, %p143
      %p146 = scmp.ne.s32.totalorder %s131, %s145
      %p147 = scmp.eq.s32.totalorder %s25, 0
      %p148 = por %p146, %p147
      %s150 = sadd.s32 %s149, 1
      %p153 = scmp.eq.s32.totalorder %s19, 3
      %p154 = scmp.ne.s32.totalorder %s149, %s151
      %p155 = scmp.eq.s32.totalorder %s19, 0
      %p156 = por %p154, %p155
      %p157 = scmp.ne.s32.totalorder %s149, %s151
      %p158 = scmp.eq.s32.totalorder %s24, 3
      %p159 = por %p157, %p158
      %p160 = scmp.ne.s32.totalorder %s151, %s152
      %p161 = scmp.eq.s32.totalorder %s24, 0
      %p162 = por %p160, %p161
      %p163 = scmp.ne.s32.totalorder %s151, %s152
      %p164 = scmp.eq.s32.totalorder %s25, 3
      %p165 = por %p163, %p164
      %p167 = scmp.ne.s32.totalorder %s152, %s166
      %p168 = scmp.eq.s32.totalorder %s25, 0
      %p169 = por %p167, %p168
      %s170 = ssub.s32 %s27, %s34
      %p171 = scmp.eq.s32.totalorder %s170, 0
      %s173 = sadd.s32 %s172, 1
      %s174 = scalar_select %p171, %s172, %s173
      %p177 = pneg %p171
      %p178 = scmp.eq.s32.totalorder %s19, 3
      %p179 = por %p177, %p178
      %p180 = scmp.ne.s32.totalorder %s172, %s175
      %p181 = scmp.eq.s32.totalorder %s19, 0
      %p182 = por %p180, %p181
      %p183 = scmp.ne.s32.totalorder %s172, %s175
      %p184 = scmp.eq.s32.totalorder %s24, 3
      %p185 = por %p183, %p184
      %p186 = scmp.ne.s32.totalorder %s175, %s176
      %p187 = scmp.eq.s32.totalorder %s24, 0
      %p188 = por %p186, %p187
      %p189 = scmp.ne.s32.totalorder %s175, %s176
      %p190 = scmp.eq.s32.totalorder %s25, 3
      %p191 = por %p189, %p190
      %p193 = scmp.ne.s32.totalorder %s176, %s192
      %p194 = scmp.eq.s32.totalorder %s25, 0
      %p195 = por %p193, %p194
      %p196 = scmp.le.s32.totalorder 1, %s19
      %p197 = scmp.lt.s32.totalorder %s19, 5
      %p198 = pnand %p196, %p197
      %p199 = pneg %p198
      // Predicated region
      $region9: #{tpu_custom_call.1} parent=5 // pred_check
        _
      $region10: #{tpu_custom_call.1} parent=5 // pred_check_branch
        %201 = sbr.rel (%p198) target = $region12
      $region11: #{tpu_custom_call.1} parent=5 // pred_region
        %s202 = ssub.s32 %s19, 1
        // Predicated region
        $region13: #{tpu_custom_call.1} parent=11 // pred_check
          %p203 = pneg %p78
        $region14: #{tpu_custom_call.1} parent=11 // pred_check_branch
          %205 = sbr.rel (%p203) target = $region16
        $region15: #{tpu_custom_call.1} parent=11 // pred_region
          %s207 = ssub.s32 32768, 32768
          %208 = vsyncadd [#allocation10], %s207
          %s209 = sshll.u32 [#allocation9], 4
          %s210 = int_to_ptr.vmem [resolvable:$true] %s209
          %215 = dma.hbm_to_vmem [thread:$0]  %s1, 32768, %s210, [#allocation10], 512, 512, 32
        $region16: #{tpu_custom_call.1} parent=11 // pred_fallthru
          _
        // Predicated region
        $region17: #{tpu_custom_call.1} parent=11 // pred_check
          %p216 = pneg %p99
        $region18: #{tpu_custom_call.1} parent=11 // pred_check_branch
          %218 = sbr.rel (%p216) target = $region20
        $region19: #{tpu_custom_call.1} parent=11 // pred_region
          _
        $region20: #{tpu_custom_call.1} parent=11 // pred_fallthru
          _
        // Predicated region
        $region21: #{tpu_custom_call.1} parent=11 // pred_check
          %p219 = pneg %p120
        $region22: #{tpu_custom_call.1} parent=11 // pred_check_branch
          %221 = sbr.rel (%p219) target = $region24
        $region23: #{tpu_custom_call.1} parent=11 // pred_region
          _
        $region24: #{tpu_custom_call.1} parent=11 // pred_fallthru
          _
        // Predicated region
        $region25: #{tpu_custom_call.1} parent=11 // pred_check
          %p222 = pneg %p141
        $region26: #{tpu_custom_call.1} parent=11 // pred_check_branch
          %224 = sbr.rel (%p222) target = $region28
        $region27: #{tpu_custom_call.1} parent=11 // pred_region
          %s226 = ssub.s32 8192, 8192
          %227 = vsyncadd [#allocation10], %s226
          %s228 = sshll.u32 [#allocation11], 4
          %s229 = int_to_ptr.vmem [resolvable:$true] %s228
          %234 = dma.hbm_to_vmem [thread:$0]  %s4, 8192, %s229, [#allocation10], 128, 128, 8
        $region28: #{tpu_custom_call.1} parent=11 // pred_fallthru
          _
        // Predicated region
        $region29: #{tpu_custom_call.1} parent=11 // pred_check
          %p235 = pneg %p162
        $region30: #{tpu_custom_call.1} parent=11 // pred_check_branch
          %237 = sbr.rel (%p235) target = $region32
        $region31: #{tpu_custom_call.1} parent=11 // pred_region
          _
        $region32: #{tpu_custom_call.1} parent=11 // pred_fallthru
          _
      $region12: #{tpu_custom_call.1} parent=5 // pred_fallthru
        _
      %p238 = scmp.lt.s32.totalorder %s19, 4
      // Predicated region
      $region33: #{tpu_custom_call.1} parent=5 // pred_check
        %p239 = pneg %p238
      $region34: #{tpu_custom_call.1} parent=5 // pred_check_branch
        %241 = sbr.rel (%p239) target = $region36
      $region35: #{tpu_custom_call.1} parent=5 // pred_region
        // Predicated region
        $region37: #{tpu_custom_call.1} parent=35 // pred_check
          %p242 = pneg %p51
        $region38: #{tpu_custom_call.1} parent=35 // pred_check_branch
          %244 = sbr.rel (%p242) target = $region40
        $region39: #{tpu_custom_call.1} parent=35 // pred_region
          %s245 = sand.u32 %s41, 1
          %s246 = scalar_lea.sflag [#allocation7], %s245
          %s247 = sand.u32 %s41, 1
          %s248 = smul.addr %s247, 512
          %s249 = scalar_lea.vmem [#allocation6], %s248
          %s250 = smul.u32 16, %s27
          %s252 = ssub.s32 8192, 8192
          %253 = vsyncadd %s246, %s252
          %s254 = smul.addr %s250, 4
          %s255 = smul.addr %s254, 128
          %s256 = scalar_lea.hbm %s0, %s255
          %s257 = sshll.u32 %s249, 4
          %s258 = int_to_ptr.vmem [resolvable:$true] %s257
          %263 = dma.hbm_to_vmem [thread:$0]  %s256, 8192, %s258, %s246, 512, 512, 32
        $region40: #{tpu_custom_call.1} parent=35 // pred_fallthru
          _
      $region36: #{tpu_custom_call.1} parent=5 // pred_fallthru
        _
      %p264 = scmp.le.s32.totalorder 1, %s19
      %p265 = scmp.lt.s32.totalorder %s19, 5
      %p266 = pnand %p264, %p265
      %p267 = pneg %p266
      // Predicated region
      $region41: #{tpu_custom_call.1} parent=5 // pred_check
        _
      $region42: #{tpu_custom_call.1} parent=5 // pred_check_branch
        %269 = sbr.rel (%p266) target = $region44
      $region43: #{tpu_custom_call.1} parent=5 // pred_region
        %s270 = ssub.s32 %s19, 1
        %s271 = sand.u32 %s44, 1
        %s272 = scalar_lea.sflag [#allocation7], %s271
        %s273 = sand.u32 %s44, 1
        %s274 = smul.addr %s273, 512
        %s275 = scalar_lea.vmem [#allocation6], %s274
        // Predicated region
        $region45: #{tpu_custom_call.1} parent=43 // pred_check
          %p276 = pneg %p57
        $region46: #{tpu_custom_call.1} parent=43 // pred_check_branch
          %278 = sbr.rel (%p276) target = $region48
        $region47: #{tpu_custom_call.1} parent=43 // pred_region
          %279 = dma.done %s272, 8192
        $region48: #{tpu_custom_call.1} parent=43 // pred_fallthru
          _
        // Predicated region
        $region49: #{tpu_custom_call.1} parent=43 // pred_check
          %p280 = pneg %p78
        $region50: #{tpu_custom_call.1} parent=43 // pred_check_branch
          %282 = sbr.rel (%p280) target = $region52
        $region51: #{tpu_custom_call.1} parent=43 // pred_region
          %283 = dma.done [#allocation10], 32768
        $region52: #{tpu_custom_call.1} parent=43 // pred_fallthru
          _
        // Predicated region
        $region53: #{tpu_custom_call.1} parent=43 // pred_check
          %p284 = pneg %p141
        $region54: #{tpu_custom_call.1} parent=43 // pred_check_branch
          %286 = sbr.rel (%p284) target = $region56
        $region55: #{tpu_custom_call.1} parent=43 // pred_region
          %287 = dma.done [#allocation10], 8192
        $region56: #{tpu_custom_call.1} parent=43 // pred_fallthru
          _
        %s288 = sand.u32 %s44, 1
        %s289 = scalar_lea.sflag [#allocation7], %s288
        %s290 = sand.u32 %s44, 1
        %s291 = smul.addr %s290, 512
        %s292 = scalar_lea.vmem [#allocation6], %s291
        %p293 = pneg %p57
        %p294 = pneg %p54
        %p295 = pneg %p78
        %p296 = pneg %p75
        %p297 = pneg %p99
        %p298 = pneg %p96
        %p299 = pneg %p120
        %p300 = pneg %p117
        %p301 = pneg %p141
        %p302 = pneg %p138
        %p303 = pneg %p162
        %p304 = pneg %p159
        %p305 = pneg %p188
        %p306 = pneg %p185
        %s307 = sand.u32 %s175, 1
        %s308 = scalar_lea.sflag [#allocation8], %s307
        %s309 = sand.u32 %s175, 1
        %s310 = smul.addr %s309, 128
        %s311 = scalar_lea.vmem [#allocation12], %s310
        %s312 = smul.u32 16, %s29
        %s313 = smul.u32 16, %s29
        %v314 = vld [vmem:[%s275] sm:$0xff]
        %v315 = vld [vmem:[%s275 + $0x8] sm:$0xff]
        %v316 = vld [vmem:[%s275 + $0x10] sm:$0xff]
        %v317 = vld [vmem:[%s275 + $0x18] sm:$0xff]
        %v318 = vld [vmem:[%s275 + $0x20] sm:$0xff]
        %v319 = vld [vmem:[%s275 + $0x28] sm:$0xff]
        %v320 = vld [vmem:[%s275 + $0x30] sm:$0xff]
        %v321 = vld [vmem:[%s275 + $0x38] sm:$0xff]
        %v322 = vld [vmem:[%s275 + $0x40] sm:$0xff]
        %v323 = vld [vmem:[%s275 + $0x48] sm:$0xff]
        %v324 = vld [vmem:[%s275 + $0x50] sm:$0xff]
        %v325 = vld [vmem:[%s275 + $0x58] sm:$0xff]
        %v326 = vld [vmem:[%s275 + $0x60] sm:$0xff]
        %v327 = vld [vmem:[%s275 + $0x68] sm:$0xff]
        %v328 = vld [vmem:[%s275 + $0x70] sm:$0xff]
        %v329 = vld [vmem:[%s275 + $0x78] sm:$0xff]
        %v330 = vld [vmem:[%s275 + $0x80] sm:$0xff]
        %v331 = vld [vmem:[%s275 + $0x88] sm:$0xff]
        %v332 = vld [vmem:[%s275 + $0x90] sm:$0xff]
        %v333 = vld [vmem:[%s275 + $0x98] sm:$0xff]
        %v334 = vld [vmem:[%s275 + $0xa0] sm:$0xff]
        %v335 = vld [vmem:[%s275 + $0xa8] sm:$0xff]
        %v336 = vld [vmem:[%s275 + $0xb0] sm:$0xff]
        %v337 = vld [vmem:[%s275 + $0xb8] sm:$0xff]
        %v338 = vld [vmem:[%s275 + $0xc0] sm:$0xff]
        %v339 = vld [vmem:[%s275 + $0xc8] sm:$0xff]
        %v340 = vld [vmem:[%s275 + $0xd0] sm:$0xff]
        %v341 = vld [vmem:[%s275 + $0xd8] sm:$0xff]
        %v342 = vld [vmem:[%s275 + $0xe0] sm:$0xff]
        %v343 = vld [vmem:[%s275 + $0xe8] sm:$0xff]
        %v344 = vld [vmem:[%s275 + $0xf0] sm:$0xff]
        %v345 = vld [vmem:[%s275 + $0xf8] sm:$0xff]
        %v346 = vld [vmem:[%s275 + $0x100] sm:$0xff]
        %v347 = vld [vmem:[%s275 + $0x108] sm:$0xff]
        %v348 = vld [vmem:[%s275 + $0x110] sm:$0xff]
        %v349 = vld [vmem:[%s275 + $0x118] sm:$0xff]
        %v350 = vld [vmem:[%s275 + $0x120] sm:$0xff]
        %v351 = vld [vmem:[%s275 + $0x128] sm:$0xff]
        %v352 = vld [vmem:[%s275 + $0x130] sm:$0xff]
        %v353 = vld [vmem:[%s275 + $0x138] sm:$0xff]
        %v354 = vld [vmem:[%s275 + $0x140] sm:$0xff]
        %v355 = vld [vmem:[%s275 + $0x148] sm:$0xff]
        %v356 = vld [vmem:[%s275 + $0x150] sm:$0xff]
        %v357 = vld [vmem:[%s275 + $0x158] sm:$0xff]
        %v358 = vld [vmem:[%s275 + $0x160] sm:$0xff]
        %v359 = vld [vmem:[%s275 + $0x168] sm:$0xff]
        %v360 = vld [vmem:[%s275 + $0x170] sm:$0xff]
        %v361 = vld [vmem:[%s275 + $0x178] sm:$0xff]
        %v362 = vld [vmem:[%s275 + $0x180] sm:$0xff]
        %v363 = vld [vmem:[%s275 + $0x188] sm:$0xff]
        %v364 = vld [vmem:[%s275 + $0x190] sm:$0xff]
        %v365 = vld [vmem:[%s275 + $0x198] sm:$0xff]
        %v366 = vld [vmem:[%s275 + $0x1a0] sm:$0xff]
        %v367 = vld [vmem:[%s275 + $0x1a8] sm:$0xff]
        %v368 = vld [vmem:[%s275 + $0x1b0] sm:$0xff]
        %v369 = vld [vmem:[%s275 + $0x1b8] sm:$0xff]
        %v370 = vld [vmem:[%s275 + $0x1c0] sm:$0xff]
        %v371 = vld [vmem:[%s275 + $0x1c8] sm:$0xff]
        %v372 = vld [vmem:[%s275 + $0x1d0] sm:$0xff]
        %v373 = vld [vmem:[%s275 + $0x1d8] sm:$0xff]
        %v374 = vld [vmem:[%s275 + $0x1e0] sm:$0xff]
        %v375 = vld [vmem:[%s275 + $0x1e8] sm:$0xff]
        %v376 = vld [vmem:[%s275 + $0x1f0] sm:$0xff]
        %v377 = vld [vmem:[%s275 + $0x1f8] sm:$0xff]
        %v378 = vld [vmem:[#allocation9] sm:$0xff]
        %v379 = vld [vmem:[#allocation9 + $0x8] sm:$0xff]
        %v380 = vld [vmem:[#allocation9 + $0x10] sm:$0xff]
        %v381 = vld [vmem:[#allocation9 + $0x18] sm:$0xff]
        %v382 = vld [vmem:[#allocation9 + $0x20] sm:$0xff]
        %v383 = vld [vmem:[#allocation9 + $0x28] sm:$0xff]
        %v384 = vld [vmem:[#allocation9 + $0x30] sm:$0xff]
        %v385 = vld [vmem:[#allocation9 + $0x38] sm:$0xff]
        %v386 = vld [vmem:[#allocation9 + $0x40] sm:$0xff]
        %v387 = vld [vmem:[#allocation9 + $0x48] sm:$0xff]
        %v388 = vld [vmem:[#allocation9 + $0x50] sm:$0xff]
        %v389 = vld [vmem:[#allocation9 + $0x58] sm:$0xff]
        %v390 = vld [vmem:[#allocation9 + $0x60] sm:$0xff]
        %v391 = vld [vmem:[#allocation9 + $0x68] sm:$0xff]
        %v392 = vld [vmem:[#allocation9 + $0x70] sm:$0xff]
        %v393 = vld [vmem:[#allocation9 + $0x78] sm:$0xff]
        %v394 = vld [vmem:[#allocation9 + $0x80] sm:$0xff]
        %v395 = vld [vmem:[#allocation9 + $0x88] sm:$0xff]
        %v396 = vld [vmem:[#allocation9 + $0x90] sm:$0xff]
        %v397 = vld [vmem:[#allocation9 + $0x98] sm:$0xff]
        %v398 = vld [vmem:[#allocation9 + $0xa0] sm:$0xff]
        %v399 = vld [vmem:[#allocation9 + $0xa8] sm:$0xff]
        %v400 = vld [vmem:[#allocation9 + $0xb0] sm:$0xff]
        %v401 = vld [vmem:[#allocation9 + $0xb8] sm:$0xff]
        %v402 = vld [vmem:[#allocation9 + $0xc0] sm:$0xff]
        %v403 = vld [vmem:[#allocation9 + $0xc8] sm:$0xff]
        %v404 = vld [vmem:[#allocation9 + $0xd0] sm:$0xff]
        %v405 = vld [vmem:[#allocation9 + $0xd8] sm:$0xff]
        %v406 = vld [vmem:[#allocation9 + $0xe0] sm:$0xff]
        %v407 = vld [vmem:[#allocation9 + $0xe8] sm:$0xff]
        %v408 = vld [vmem:[#allocation9 + $0xf0] sm:$0xff]
        %v409 = vld [vmem:[#allocation9 + $0xf8] sm:$0xff]
        %v410 = vld [vmem:[#allocation9 + $0x100] sm:$0xff]
        %v411 = vld [vmem:[#allocation9 + $0x108] sm:$0xff]
        %v412 = vld [vmem:[#allocation9 + $0x110] sm:$0xff]
        %v413 = vld [vmem:[#allocation9 + $0x118] sm:$0xff]
        %v414 = vld [vmem:[#allocation9 + $0x120] sm:$0xff]
        %v415 = vld [vmem:[#allocation9 + $0x128] sm:$0xff]
        %v416 = vld [vmem:[#allocation9 + $0x130] sm:$0xff]
        %v417 = vld [vmem:[#allocation9 + $0x138] sm:$0xff]
        %v418 = vld [vmem:[#allocation9 + $0x140] sm:$0xff]
        %v419 = vld [vmem:[#allocation9 + $0x148] sm:$0xff]
        %v420 = vld [vmem:[#allocation9 + $0x150] sm:$0xff]
        %v421 = vld [vmem:[#allocation9 + $0x158] sm:$0xff]
        %v422 = vld [vmem:[#allocation9 + $0x160] sm:$0xff]
        %v423 = vld [vmem:[#allocation9 + $0x168] sm:$0xff]
        %v424 = vld [vmem:[#allocation9 + $0x170] sm:$0xff]
        %v425 = vld [vmem:[#allocation9 + $0x178] sm:$0xff]
        %v426 = vld [vmem:[#allocation9 + $0x180] sm:$0xff]
        %v427 = vld [vmem:[#allocation9 + $0x188] sm:$0xff]
        %v428 = vld [vmem:[#allocation9 + $0x190] sm:$0xff]
        %v429 = vld [vmem:[#allocation9 + $0x198] sm:$0xff]
        %v430 = vld [vmem:[#allocation9 + $0x1a0] sm:$0xff]
        %v431 = vld [vmem:[#allocation9 + $0x1a8] sm:$0xff]
        %v432 = vld [vmem:[#allocation9 + $0x1b0] sm:$0xff]
        %v433 = vld [vmem:[#allocation9 + $0x1b8] sm:$0xff]
        %v434 = vld [vmem:[#allocation9 + $0x1c0] sm:$0xff]
        %v435 = vld [vmem:[#allocation9 + $0x1c8] sm:$0xff]
        %v436 = vld [vmem:[#allocation9 + $0x1d0] sm:$0xff]
        %v437 = vld [vmem:[#allocation9 + $0x1d8] sm:$0xff]
        %v438 = vld [vmem:[#allocation9 + $0x1e0] sm:$0xff]
        %v439 = vld [vmem:[#allocation9 + $0x1e8] sm:$0xff]
        %v440 = vld [vmem:[#allocation9 + $0x1f0] sm:$0xff]
        %v441 = vld [vmem:[#allocation9 + $0x1f8] sm:$0xff]
        %v442 = vld [vmem:[#allocation9 + $0x200] sm:$0xff]
        %v443 = vld [vmem:[#allocation9 + $0x208] sm:$0xff]
        %v444 = vld [vmem:[#allocation9 + $0x210] sm:$0xff]
        %v445 = vld [vmem:[#allocation9 + $0x218] sm:$0xff]
        %v446 = vld [vmem:[#allocation9 + $0x220] sm:$0xff]
        %v447 = vld [vmem:[#allocation9 + $0x228] sm:$0xff]
        %v448 = vld [vmem:[#allocation9 + $0x230] sm:$0xff]
        %v449 = vld [vmem:[#allocation9 + $0x238] sm:$0xff]
        %v450 = vld [vmem:[#allocation9 + $0x240] sm:$0xff]
        %v451 = vld [vmem:[#allocation9 + $0x248] sm:$0xff]
        %v452 = vld [vmem:[#allocation9 + $0x250] sm:$0xff]
        %v453 = vld [vmem:[#allocation9 + $0x258] sm:$0xff]
        %v454 = vld [vmem:[#allocation9 + $0x260] sm:$0xff]
        %v455 = vld [vmem:[#allocation9 + $0x268] sm:$0xff]
        %v456 = vld [vmem:[#allocation9 + $0x270] sm:$0xff]
        %v457 = vld [vmem:[#allocation9 + $0x278] sm:$0xff]
        %v458 = vld [vmem:[#allocation9 + $0x280] sm:$0xff]
        %v459 = vld [vmem:[#allocation9 + $0x288] sm:$0xff]
        %v460 = vld [vmem:[#allocation9 + $0x290] sm:$0xff]
        %v461 = vld [vmem:[#allocation9 + $0x298] sm:$0xff]
        %v462 = vld [vmem:[#allocation9 + $0x2a0] sm:$0xff]
        %v463 = vld [vmem:[#allocation9 + $0x2a8] sm:$0xff]
        %v464 = vld [vmem:[#allocation9 + $0x2b0] sm:$0xff]
        %v465 = vld [vmem:[#allocation9 + $0x2b8] sm:$0xff]
        %v466 = vld [vmem:[#allocation9 + $0x2c0] sm:$0xff]
        %v467 = vld [vmem:[#allocation9 + $0x2c8] sm:$0xff]
        %v468 = vld [vmem:[#allocation9 + $0x2d0] sm:$0xff]
        %v469 = vld [vmem:[#allocation9 + $0x2d8] sm:$0xff]
        %v470 = vld [vmem:[#allocation9 + $0x2e0] sm:$0xff]
        %v471 = vld [vmem:[#allocation9 + $0x2e8] sm:$0xff]
        %v472 = vld [vmem:[#allocation9 + $0x2f0] sm:$0xff]
        %v473 = vld [vmem:[#allocation9 + $0x2f8] sm:$0xff]
        %v474 = vld [vmem:[#allocation9 + $0x300] sm:$0xff]
        %v475 = vld [vmem:[#allocation9 + $0x308] sm:$0xff]
        %v476 = vld [vmem:[#allocation9 + $0x310] sm:$0xff]
        %v477 = vld [vmem:[#allocation9 + $0x318] sm:$0xff]
        %v478 = vld [vmem:[#allocation9 + $0x320] sm:$0xff]
        %v479 = vld [vmem:[#allocation9 + $0x328] sm:$0xff]
        %v480 = vld [vmem:[#allocation9 + $0x330] sm:$0xff]
        %v481 = vld [vmem:[#allocation9 + $0x338] sm:$0xff]
        %v482 = vld [vmem:[#allocation9 + $0x340] sm:$0xff]
        %v483 = vld [vmem:[#allocation9 + $0x348] sm:$0xff]
        %v484 = vld [vmem:[#allocation9 + $0x350] sm:$0xff]
        %v485 = vld [vmem:[#allocation9 + $0x358] sm:$0xff]
        %v486 = vld [vmem:[#allocation9 + $0x360] sm:$0xff]
        %v487 = vld [vmem:[#allocation9 + $0x368] sm:$0xff]
        %v488 = vld [vmem:[#allocation9 + $0x370] sm:$0xff]
        %v489 = vld [vmem:[#allocation9 + $0x378] sm:$0xff]
        %v490 = vld [vmem:[#allocation9 + $0x380] sm:$0xff]
        %v491 = vld [vmem:[#allocation9 + $0x388] sm:$0xff]
        %v492 = vld [vmem:[#allocation9 + $0x390] sm:$0xff]
        %v493 = vld [vmem:[#allocation9 + $0x398] sm:$0xff]
        %v494 = vld [vmem:[#allocation9 + $0x3a0] sm:$0xff]
        %v495 = vld [vmem:[#allocation9 + $0x3a8] sm:$0xff]
        %v496 = vld [vmem:[#allocation9 + $0x3b0] sm:$0xff]
        %v497 = vld [vmem:[#allocation9 + $0x3b8] sm:$0xff]
        %v498 = vld [vmem:[#allocation9 + $0x3c0] sm:$0xff]
        %v499 = vld [vmem:[#allocation9 + $0x3c8] sm:$0xff]
        %v500 = vld [vmem:[#allocation9 + $0x3d0] sm:$0xff]
        %v501 = vld [vmem:[#allocation9 + $0x3d8] sm:$0xff]
        %v502 = vld [vmem:[#allocation9 + $0x3e0] sm:$0xff]
        %v503 = vld [vmem:[#allocation9 + $0x3e8] sm:$0xff]
        %v504 = vld [vmem:[#allocation9 + $0x3f0] sm:$0xff]
        %v505 = vld [vmem:[#allocation9 + $0x3f8] sm:$0xff]
        %v506 = vld [vmem:[#allocation9 + $0x400] sm:$0xff]
        %v507 = vld [vmem:[#allocation9 + $0x408] sm:$0xff]
        %v508 = vld [vmem:[#allocation9 + $0x410] sm:$0xff]
        %v509 = vld [vmem:[#allocation9 + $0x418] sm:$0xff]
        %v510 = vld [vmem:[#allocation9 + $0x420] sm:$0xff]
        %v511 = vld [vmem:[#allocation9 + $0x428] sm:$0xff]
        %v512 = vld [vmem:[#allocation9 + $0x430] sm:$0xff]
        %v513 = vld [vmem:[#allocation9 + $0x438] sm:$0xff]
        %v514 = vld [vmem:[#allocation9 + $0x440] sm:$0xff]
        %v515 = vld [vmem:[#allocation9 + $0x448] sm:$0xff]
        %v516 = vld [vmem:[#allocation9 + $0x450] sm:$0xff]
        %v517 = vld [vmem:[#allocation9 + $0x458] sm:$0xff]
        %v518 = vld [vmem:[#allocation9 + $0x460] sm:$0xff]
        %v519 = vld [vmem:[#allocation9 + $0x468] sm:$0xff]
        %v520 = vld [vmem:[#allocation9 + $0x470] sm:$0xff]
        %v521 = vld [vmem:[#allocation9 + $0x478] sm:$0xff]
        %v522 = vld [vmem:[#allocation9 + $0x480] sm:$0xff]
        %v523 = vld [vmem:[#allocation9 + $0x488] sm:$0xff]
        %v524 = vld [vmem:[#allocation9 + $0x490] sm:$0xff]
        %v525 = vld [vmem:[#allocation9 + $0x498] sm:$0xff]
        %v526 = vld [vmem:[#allocation9 + $0x4a0] sm:$0xff]
        %v527 = vld [vmem:[#allocation9 + $0x4a8] sm:$0xff]
        %v528 = vld [vmem:[#allocation9 + $0x4b0] sm:$0xff]
        %v529 = vld [vmem:[#allocation9 + $0x4b8] sm:$0xff]
        %v530 = vld [vmem:[#allocation9 + $0x4c0] sm:$0xff]
        %v531 = vld [vmem:[#allocation9 + $0x4c8] sm:$0xff]
        %v532 = vld [vmem:[#allocation9 + $0x4d0] sm:$0xff]
        %v533 = vld [vmem:[#allocation9 + $0x4d8] sm:$0xff]
        %v534 = vld [vmem:[#allocation9 + $0x4e0] sm:$0xff]
        %v535 = vld [vmem:[#allocation9 + $0x4e8] sm:$0xff]
        %v536 = vld [vmem:[#allocation9 + $0x4f0] sm:$0xff]
        %v537 = vld [vmem:[#allocation9 + $0x4f8] sm:$0xff]
        %v538 = vld [vmem:[#allocation9 + $0x500] sm:$0xff]
        %v539 = vld [vmem:[#allocation9 + $0x508] sm:$0xff]
        %v540 = vld [vmem:[#allocation9 + $0x510] sm:$0xff]
        %v541 = vld [vmem:[#allocation9 + $0x518] sm:$0xff]
        %v542 = vld [vmem:[#allocation9 + $0x520] sm:$0xff]
        %v543 = vld [vmem:[#allocation9 + $0x528] sm:$0xff]
        %v544 = vld [vmem:[#allocation9 + $0x530] sm:$0xff]
        %v545 = vld [vmem:[#allocation9 + $0x538] sm:$0xff]
        %v546 = vld [vmem:[#allocation9 + $0x540] sm:$0xff]
        %v547 = vld [vmem:[#allocation9 + $0x548] sm:$0xff]
        %v548 = vld [vmem:[#allocation9 + $0x550] sm:$0xff]
        %v549 = vld [vmem:[#allocation9 + $0x558] sm:$0xff]
        %v550 = vld [vmem:[#allocation9 + $0x560] sm:$0xff]
        %v551 = vld [vmem:[#allocation9 + $0x568] sm:$0xff]
        %v552 = vld [vmem:[#allocation9 + $0x570] sm:$0xff]
        %v553 = vld [vmem:[#allocation9 + $0x578] sm:$0xff]
        %v554 = vld [vmem:[#allocation9 + $0x580] sm:$0xff]
        %v555 = vld [vmem:[#allocation9 + $0x588] sm:$0xff]
        %v556 = vld [vmem:[#allocation9 + $0x590] sm:$0xff]
        %v557 = vld [vmem:[#allocation9 + $0x598] sm:$0xff]
        %v558 = vld [vmem:[#allocation9 + $0x5a0] sm:$0xff]
        %v559 = vld [vmem:[#allocation9 + $0x5a8] sm:$0xff]
        %v560 = vld [vmem:[#allocation9 + $0x5b0] sm:$0xff]
        %v561 = vld [vmem:[#allocation9 + $0x5b8] sm:$0xff]
        %v562 = vld [vmem:[#allocation9 + $0x5c0] sm:$0xff]
        %v563 = vld [vmem:[#allocation9 + $0x5c8] sm:$0xff]
        %v564 = vld [vmem:[#allocation9 + $0x5d0] sm:$0xff]
        %v565 = vld [vmem:[#allocation9 + $0x5d8] sm:$0xff]
        %v566 = vld [vmem:[#allocation9 + $0x5e0] sm:$0xff]
        %v567 = vld [vmem:[#allocation9 + $0x5e8] sm:$0xff]
        %v568 = vld [vmem:[#allocation9 + $0x5f0] sm:$0xff]
        %v569 = vld [vmem:[#allocation9 + $0x5f8] sm:$0xff]
        %v570 = vld [vmem:[#allocation9 + $0x600] sm:$0xff]
        %v571 = vld [vmem:[#allocation9 + $0x608] sm:$0xff]
        %v572 = vld [vmem:[#allocation9 + $0x610] sm:$0xff]
        %v573 = vld [vmem:[#allocation9 + $0x618] sm:$0xff]
        %v574 = vld [vmem:[#allocation9 + $0x620] sm:$0xff]
        %v575 = vld [vmem:[#allocation9 + $0x628] sm:$0xff]
        %v576 = vld [vmem:[#allocation9 + $0x630] sm:$0xff]
        %v577 = vld [vmem:[#allocation9 + $0x638] sm:$0xff]
        %v578 = vld [vmem:[#allocation9 + $0x640] sm:$0xff]
        %v579 = vld [vmem:[#allocation9 + $0x648] sm:$0xff]
        %v580 = vld [vmem:[#allocation9 + $0x650] sm:$0xff]
        %v581 = vld [vmem:[#allocation9 + $0x658] sm:$0xff]
        %v582 = vld [vmem:[#allocation9 + $0x660] sm:$0xff]
        %v583 = vld [vmem:[#allocation9 + $0x668] sm:$0xff]
        %v584 = vld [vmem:[#allocation9 + $0x670] sm:$0xff]
        %v585 = vld [vmem:[#allocation9 + $0x678] sm:$0xff]
        %v586 = vld [vmem:[#allocation9 + $0x680] sm:$0xff]
        %v587 = vld [vmem:[#allocation9 + $0x688] sm:$0xff]
        %v588 = vld [vmem:[#allocation9 + $0x690] sm:$0xff]
        %v589 = vld [vmem:[#allocation9 + $0x698] sm:$0xff]
        %v590 = vld [vmem:[#allocation9 + $0x6a0] sm:$0xff]
        %v591 = vld [vmem:[#allocation9 + $0x6a8] sm:$0xff]
        %v592 = vld [vmem:[#allocation9 + $0x6b0] sm:$0xff]
        %v593 = vld [vmem:[#allocation9 + $0x6b8] sm:$0xff]
        %v594 = vld [vmem:[#allocation9 + $0x6c0] sm:$0xff]
        %v595 = vld [vmem:[#allocation9 + $0x6c8] sm:$0xff]
        %v596 = vld [vmem:[#allocation9 + $0x6d0] sm:$0xff]
        %v597 = vld [vmem:[#allocation9 + $0x6d8] sm:$0xff]
        %v598 = vld [vmem:[#allocation9 + $0x6e0] sm:$0xff]
        %v599 = vld [vmem:[#allocation9 + $0x6e8] sm:$0xff]
        %v600 = vld [vmem:[#allocation9 + $0x6f0] sm:$0xff]
        %v601 = vld [vmem:[#allocation9 + $0x6f8] sm:$0xff]
        %v602 = vld [vmem:[#allocation9 + $0x700] sm:$0xff]
        %v603 = vld [vmem:[#allocation9 + $0x708] sm:$0xff]
        %v604 = vld [vmem:[#allocation9 + $0x710] sm:$0xff]
        %v605 = vld [vmem:[#allocation9 + $0x718] sm:$0xff]
        %v606 = vld [vmem:[#allocation9 + $0x720] sm:$0xff]
        %v607 = vld [vmem:[#allocation9 + $0x728] sm:$0xff]
        %v608 = vld [vmem:[#allocation9 + $0x730] sm:$0xff]
        %v609 = vld [vmem:[#allocation9 + $0x738] sm:$0xff]
        %v610 = vld [vmem:[#allocation9 + $0x740] sm:$0xff]
        %v611 = vld [vmem:[#allocation9 + $0x748] sm:$0xff]
        %v612 = vld [vmem:[#allocation9 + $0x750] sm:$0xff]
        %v613 = vld [vmem:[#allocation9 + $0x758] sm:$0xff]
        %v614 = vld [vmem:[#allocation9 + $0x760] sm:$0xff]
        %v615 = vld [vmem:[#allocation9 + $0x768] sm:$0xff]
        %v616 = vld [vmem:[#allocation9 + $0x770] sm:$0xff]
        %v617 = vld [vmem:[#allocation9 + $0x778] sm:$0xff]
        %v618 = vld [vmem:[#allocation9 + $0x780] sm:$0xff]
        %v619 = vld [vmem:[#allocation9 + $0x788] sm:$0xff]
        %v620 = vld [vmem:[#allocation9 + $0x790] sm:$0xff]
        %v621 = vld [vmem:[#allocation9 + $0x798] sm:$0xff]
        %v622 = vld [vmem:[#allocation9 + $0x7a0] sm:$0xff]
        %v623 = vld [vmem:[#allocation9 + $0x7a8] sm:$0xff]
        %v624 = vld [vmem:[#allocation9 + $0x7b0] sm:$0xff]
        %v625 = vld [vmem:[#allocation9 + $0x7b8] sm:$0xff]
        %v626 = vld [vmem:[#allocation9 + $0x7c0] sm:$0xff]
        %v627 = vld [vmem:[#allocation9 + $0x7c8] sm:$0xff]
        %v628 = vld [vmem:[#allocation9 + $0x7d0] sm:$0xff]
        %v629 = vld [vmem:[#allocation9 + $0x7d8] sm:$0xff]
        %v630 = vld [vmem:[#allocation9 + $0x7e0] sm:$0xff]
        %v631 = vld [vmem:[#allocation9 + $0x7e8] sm:$0xff]
        %v632 = vld [vmem:[#allocation9 + $0x7f0] sm:$0xff]
        %v633 = vld [vmem:[#allocation9 + $0x7f8] sm:$0xff]
        %634 = vmatprep.subr.mxu0 %v379
        %635 = vmatpush1.msra.mxu0 %v378
        %636 = vmatprep.subr.mxu0 %v383
        %637 = vmatpush1.msra.mxu0 %v382
        %638 = vmatprep.subr.mxu0 %v387
        %639 = vmatpush1.msra.mxu0 %v386
        %640 = vmatprep.subr.mxu0 %v391
        %641 = vmatpush1.msra.mxu0 %v390
        %642 = vmatprep.subr.mxu0 %v395
        %643 = vmatpush1.msra.mxu0 %v394
        %644 = vmatprep.subr.mxu0 %v399
        %645 = vmatpush1.msra.mxu0 %v398
        %646 = vmatprep.subr.mxu0 %v403
        %647 = vmatpush1.msra.mxu0 %v402
        %648 = vmatprep.subr.mxu0 %v407
        %649 = vmatpush1.msra.mxu0 %v406
        %650 = vmatprep.subr.mxu0 %v411
        %651 = vmatpush1.msra.mxu0 %v410
        %652 = vmatprep.subr.mxu0 %v415
        %653 = vmatpush1.msra.mxu0 %v414
        %654 = vmatprep.subr.mxu0 %v419
        %655 = vmatpush1.msra.mxu0 %v418
        %656 = vmatprep.subr.mxu0 %v423
        %657 = vmatpush1.msra.mxu0 %v422
        %658 = vmatprep.subr.mxu0 %v427
        %659 = vmatpush1.msra.mxu0 %v426
        %660 = vmatprep.subr.mxu0 %v431
        %661 = vmatpush1.msra.mxu0 %v430
        %662 = vmatprep.subr.mxu0 %v435
        %663 = vmatpush1.msra.mxu0 %v434
        %664 = vmatprep.subr.mxu0 %v439
        %665 = vmatpush1.msra.mxu0 %v438
        %666 = vmatprep.subr.mxu0 %v443
        %667 = vmatpush1.msra.mxu0 %v442
        %668 = vmatprep.subr.mxu0 %v447
        %669 = vmatpush1.msra.mxu0 %v446
        %670 = vmatprep.subr.mxu0 %v451
        %671 = vmatpush1.msra.mxu0 %v450
        %672 = vmatprep.subr.mxu0 %v455
        %673 = vmatpush1.msra.mxu0 %v454
        %674 = vmatprep.subr.mxu0 %v459
        %675 = vmatpush1.msra.mxu0 %v458
        %676 = vmatprep.subr.mxu0 %v463
        %677 = vmatpush1.msra.mxu0 %v462
        %678 = vmatprep.subr.mxu0 %v467
        %679 = vmatpush1.msra.mxu0 %v466
        %680 = vmatprep.subr.mxu0 %v471
        %681 = vmatpush1.msra.mxu0 %v470
        %682 = vmatprep.subr.mxu0 %v475
        %683 = vmatpush1.msra.mxu0 %v474
        %684 = vmatprep.subr.mxu0 %v479
        %685 = vmatpush1.msra.mxu0 %v478
        %686 = vmatprep.subr.mxu0 %v483
        %687 = vmatpush1.msra.mxu0 %v482
        %688 = vmatprep.subr.mxu0 %v487
        %689 = vmatpush1.msra.mxu0 %v486
        %690 = vmatprep.subr.mxu0 %v491
        %691 = vmatpush1.msra.mxu0 %v490
        %692 = vmatprep.subr.mxu0 %v495
        %693 = vmatpush1.msra.mxu0 %v494
        %694 = vmatprep.subr.mxu0 %v499
        %695 = vmatpush1.msra.mxu0 %v498
        %696 = vmatprep.subr.mxu0 %v503
        %697 = vmatpush1.msra.mxu0 %v502
        %698 = vmatprep.mubr.f32.mxu0 %v315
        %699 = vmatmul.mubr.f32.gmra.mrb[0].mxu0 %v314
        %v700 = vpop.f32.mrb[0].mxu0
        %v701 = vadd.f32 0.0, %v700
        %v702 = vpop.f32.mrb[0].mxu0
        %v703 = vadd.f32 0.0, %v702
        %704 = vmatprep.mubr.f32.mxu0 %v319
        %705 = vmatmul.mubr.f32.gmra.mrb[0].mxu0 %v318
        %v706 = vpop.f32.mrb[0].mxu0
        %v707 = vadd.f32 0.0, %v706
        %v708 = vpop.f32.mrb[0].mxu0
        %v709 = vadd.f32 0.0, %v708
        %710 = vmatprep.mubr.f32.mxu0 %v323
        %711 = vmatmul.mubr.f32.gmra.mrb[0].mxu0 %v322
        %v712 = vpop.f32.mrb[0].mxu0
        %v713 = vadd.f32 0.0, %v712
        %v714 = vpop.f32.mrb[0].mxu0
        %v715 = vadd.f32 0.0, %v714
        %716 = vmatprep.mubr.f32.mxu0 %v327
        %717 = vmatmul.mubr.f32.gmra.mrb[0].mxu0 %v326
        %v718 = vpop.f32.mrb[0].mxu0
        %v719 = vadd.f32 0.0, %v718
        %v720 = vpop.f32.mrb[0].mxu0
        %v721 = vadd.f32 0.0, %v720
        %722 = vmatprep.mubr.f32.mxu0 %v331
        %723 = vmatmul.mubr.f32.gmra.mrb[0].mxu0 %v330
        %v724 = vpop.f32.mrb[0].mxu0
        %v725 = vadd.f32 0.0, %v724
        %v726 = vpop.f32.mrb[0].mxu0
        %v727 = vadd.f32 0.0, %v726
        %728 = vmatprep.mubr.f32.mxu0 %v335
        %729 = vmatmul.mubr.f32.gmra.mrb[0].mxu0 %v334
        %v730 = vpop.f32.mrb[0].mxu0
        %v731 = vadd.f32 0.0, %v730
        %v732 = vpop.f32.mrb[0].mxu0
        %v733 = vadd.f32 0.0, %v732
        %734 = vmatprep.mubr.f32.mxu0 %v339
        %735 = vmatmul.mubr.f32.gmra.mrb[0].mxu0 %v338
        %v736 = vpop.f32.mrb[0].mxu0
        %v737 = vadd.f32 0.0, %v736
        %v738 = vpop.f32.mrb[0].mxu0
        %v739 = vadd.f32 0.0, %v738
        %740 = vmatprep.mubr.f32.mxu0 %v343
        %741 = vmatmul.mubr.f32.gmra.mrb[0].mxu0 %v342
        %v742 = vpop.f32.mrb[0].mxu0
        %v743 = vadd.f32 0.0, %v742
        %v744 = vpop.f32.mrb[0].mxu0
        %v745 = vadd.f32 0.0, %v744
        %746 = vmatprep.mubr.f32.mxu0 %v347
        %747 = vmatmul.mubr.f32.gmra.mrb[0].mxu0 %v346
        %v748 = vpop.f32.mrb[0].mxu0
        %v749 = vadd.f32 0.0, %v748
        %v750 = vpop.f32.mrb[0].mxu0
        %v751 = vadd.f32 0.0, %v750
        %752 = vmatprep.mubr.f32.mxu0 %v351
        %753 = vmatmul.mubr.f32.gmra.mrb[0].mxu0 %v350
        %v754 = vpop.f32.mrb[0].mxu0
        %v755 = vadd.f32 0.0, %v754
        %v756 = vpop.f32.mrb[0].mxu0
        %v757 = vadd.f32 0.0, %v756
        %758 = vmatprep.mubr.f32.mxu0 %v355
        %759 = vmatmul.mubr.f32.gmra.mrb[0].mxu0 %v354
        %v760 = vpop.f32.mrb[0].mxu0
        %v761 = vadd.f32 0.0, %v760
        %v762 = vpop.f32.mrb[0].mxu0
        %v763 = vadd.f32 0.0, %v762
        %764 = vmatprep.mubr.f32.mxu0 %v359
        %765 = vmatmul.mubr.f32.gmra.mrb[0].mxu0 %v358
        %v766 = vpop.f32.mrb[0].mxu0
        %v767 = vadd.f32 0.0, %v766
        %v768 = vpop.f32.mrb[0].mxu0
        %v769 = vadd.f32 0.0, %v768
        %770 = vmatprep.mubr.f32.mxu0 %v363
        %771 = vmatmul.mubr.f32.gmra.mrb[0].mxu0 %v362
        %v772 = vpop.f32.mrb[0].mxu0
        %v773 = vadd.f32 0.0, %v772
        %v774 = vpop.f32.mrb[0].mxu0
        %v775 = vadd.f32 0.0, %v774
        %776 = vmatprep.mubr.f32.mxu0 %v367
        %777 = vmatmul.mubr.f32.gmra.mrb[0].mxu0 %v366
        %v778 = vpop.f32.mrb[0].mxu0
        %v779 = vadd.f32 0.0, %v778
        %v780 = vpop.f32.mrb[0].mxu0
        %v781 = vadd.f32 0.0, %v780
        %782 = vmatprep.mubr.f32.mxu0 %v371
        %783 = vmatmul.mubr.f32.gmra.mrb[0].mxu0 %v370
        %v784 = vpop.f32.mrb[0].mxu0
        %v785 = vadd.f32 0.0, %v784
        %v786 = vpop.f32.mrb[0].mxu0
        %v787 = vadd.f32 0.0, %v786
        %788 = vmatprep.mubr.f32.mxu0 %v375
        %789 = vmatmul.mubr.f32.gmra.mrb[0].mxu0 %v374
        %v790 = vpop.f32.mrb[0].mxu0
        %v791 = vadd.f32 0.0, %v790
        %v792 = vpop.f32.mrb[0].mxu0
        %v793 = vadd.f32 0.0, %v792
        %794 = vdwg.mxu0
        %795 = vmatprep.subr.mxu0 %v507
        %796 = vmatpush1.msra.mxu0 %v506
        %797 = vmatprep.subr.mxu0 %v511
        %798 = vmatpush1.msra.mxu0 %v510
        %799 = vmatprep.subr.mxu0 %v515
        %800 = vmatpush1.msra.mxu0 %v514
        %801 = vmatprep.subr.mxu0 %v519
        %802 = vmatpush1.msra.mxu0 %v518
        %803 = vmatprep.subr.mxu0 %v523
        %804 = vmatpush1.msra.mxu0 %v522
        %805 = vmatprep.subr.mxu0 %v527
        %806 = vmatpush1.msra.mxu0 %v526
        %807 = vmatprep.subr.mxu0 %v531
        %808 = vmatpush1.msra.mxu0 %v530
        %809 = vmatprep.subr.mxu0 %v535
        %810 = vmatpush1.msra.mxu0 %v534
        %811 = vmatprep.subr.mxu0 %v539
        %812 = vmatpush1.msra.mxu0 %v538
        %813 = vmatprep.subr.mxu0 %v543
        %814 = vmatpush1.msra.mxu0 %v542
        %815 = vmatprep.subr.mxu0 %v547
        %816 = vmatpush1.msra.mxu0 %v546
        %817 = vmatprep.subr.mxu0 %v551
        %818 = vmatpush1.msra.mxu0 %v550
        %819 = vmatprep.subr.mxu0 %v555
        %820 = vmatpush1.msra.mxu0 %v554
        %821 = vmatprep.subr.mxu0 %v559
        %822 = vmatpush1.msra.mxu0 %v558
        %823 = vmatprep.subr.mxu0 %v563
        %824 = vmatpush1.msra.mxu0 %v562
        %825 = vmatprep.subr.mxu0 %v567
        %826 = vmatpush1.msra.mxu0 %v566
        %827 = vmatprep.subr.mxu0 %v571
        %828 = vmatpush1.msra.mxu0 %v570
        %829 = vmatprep.subr.mxu0 %v575
        %830 = vmatpush1.msra.mxu0 %v574
        %831 = vmatprep.subr.mxu0 %v579
        %832 = vmatpush1.msra.mxu0 %v578
        %833 = vmatprep.subr.mxu0 %v583
        %834 = vmatpush1.msra.mxu0 %v582
        %835 = vmatprep.subr.mxu0 %v587
        %836 = vmatpush1.msra.mxu0 %v586
        %837 = vmatprep.subr.mxu0 %v591
        %838 = vmatpush1.msra.mxu0 %v590
        %839 = vmatprep.subr.mxu0 %v595
        %840 = vmatpush1.msra.mxu0 %v594
        %841 = vmatprep.subr.mxu0 %v599
        %842 = vmatpush1.msra.mxu0 %v598
        %843 = vmatprep.subr.mxu0 %v603
        %844 = vmatpush1.msra.mxu0 %v602
        %845 = vmatprep.subr.mxu0 %v607
        %846 = vmatpush1.msra.mxu0 %v606
        %847 = vmatprep.subr.mxu0 %v611
        %848 = vmatpush1.msra.mxu0 %v610
        %849 = vmatprep.subr.mxu0 %v615
        %850 = vmatpush1.msra.mxu0 %v614
        %851 = vmatprep.subr.mxu0 %v619
        %852 = vmatpush1.msra.mxu0 %v618
        %853 = vmatprep.subr.mxu0 %v623
        %854 = vmatpush1.msra.mxu0 %v622
        %855 = vmatprep.subr.mxu0 %v627
        %856 = vmatpush1.msra.mxu0 %v626
        %857 = vmatprep.subr.mxu0 %v631
        %858 = vmatpush1.msra.mxu0 %v630
        %859 = vmatprep.mubr.f32.mxu0 %v317
        %860 = vmatmul.mubr.f32.gmra.mrb[0].mxu0 %v316
        %v861 = vpop.f32.mrb[0].mxu0
        %v862 = vadd.f32 %v701, %v861
        %v863 = vpop.f32.mrb[0].mxu0
        %v864 = vadd.f32 %v703, %v863
        %865 = vmatprep.mubr.f32.mxu0 %v321
        %866 = vmatmul.mubr.f32.gmra.mrb[0].mxu0 %v320
        %v867 = vpop.f32.mrb[0].mxu0
        %v868 = vadd.f32 %v707, %v867
        %v869 = vpop.f32.mrb[0].mxu0
        %v870 = vadd.f32 %v709, %v869
        %871 = vmatprep.mubr.f32.mxu0 %v325
        %872 = vmatmul.mubr.f32.gmra.mrb[0].mxu0 %v324
        %v873 = vpop.f32.mrb[0].mxu0
        %v874 = vadd.f32 %v713, %v873
        %v875 = vpop.f32.mrb[0].mxu0
        %v876 = vadd.f32 %v715, %v875
        %877 = vmatprep.mubr.f32.mxu0 %v329
        %878 = vmatmul.mubr.f32.gmra.mrb[0].mxu0 %v328
        %v879 = vpop.f32.mrb[0].mxu0
        %v880 = vadd.f32 %v719, %v879
        %v881 = vpop.f32.mrb[0].mxu0
        %v882 = vadd.f32 %v721, %v881
        %883 = vmatprep.mubr.f32.mxu0 %v333
        %884 = vmatmul.mubr.f32.gmra.mrb[0].mxu0 %v332
        %v885 = vpop.f32.mrb[0].mxu0
        %v886 = vadd.f32 %v725, %v885
        %v887 = vpop.f32.mrb[0].mxu0
        %v888 = vadd.f32 %v727, %v887
        %889 = vmatprep.mubr.f32.mxu0 %v337
        %890 = vmatmul.mubr.f32.gmra.mrb[0].mxu0 %v336
        %v891 = vpop.f32.mrb[0].mxu0
        %v892 = vadd.f32 %v731, %v891
        %v893 = vpop.f32.mrb[0].mxu0
        %v894 = vadd.f32 %v733, %v893
        %895 = vmatprep.mubr.f32.mxu0 %v341
        %896 = vmatmul.mubr.f32.gmra.mrb[0].mxu0 %v340
        %v897 = vpop.f32.mrb[0].mxu0
        %v898 = vadd.f32 %v737, %v897
        %v899 = vpop.f32.mrb[0].mxu0
        %v900 = vadd.f32 %v739, %v899
        %901 = vmatprep.mubr.f32.mxu0 %v345
        %902 = vmatmul.mubr.f32.gmra.mrb[0].mxu0 %v344
        %v903 = vpop.f32.mrb[0].mxu0
        %v904 = vadd.f32 %v743, %v903
        %v905 = vpop.f32.mrb[0].mxu0
        %v906 = vadd.f32 %v745, %v905
        %907 = vmatprep.mubr.f32.mxu0 %v349
        %908 = vmatmul.mubr.f32.gmra.mrb[0].mxu0 %v348
        %v909 = vpop.f32.mrb[0].mxu0
        %v910 = vadd.f32 %v749, %v909
        %v911 = vpop.f32.mrb[0].mxu0
        %v912 = vadd.f32 %v751, %v911
        %913 = vmatprep.mubr.f32.mxu0 %v353
        %914 = vmatmul.mubr.f32.gmra.mrb[0].mxu0 %v352
        %v915 = vpop.f32.mrb[0].mxu0
        %v916 = vadd.f32 %v755, %v915
        %v917 = vpop.f32.mrb[0].mxu0
        %v918 = vadd.f32 %v757, %v917
        %919 = vmatprep.mubr.f32.mxu0 %v357
        %920 = vmatmul.mubr.f32.gmra.mrb[0].mxu0 %v356
        %v921 = vpop.f32.mrb[0].mxu0
        %v922 = vadd.f32 %v761, %v921
        %v923 = vpop.f32.mrb[0].mxu0
        %v924 = vadd.f32 %v763, %v923
        %925 = vmatprep.mubr.f32.mxu0 %v361
        %926 = vmatmul.mubr.f32.gmra.mrb[0].mxu0 %v360
        %v927 = vpop.f32.mrb[0].mxu0
        %v928 = vadd.f32 %v767, %v927
        %v929 = vpop.f32.mrb[0].mxu0
        %v930 = vadd.f32 %v769, %v929
        %931 = vmatprep.mubr.f32.mxu0 %v365
        %932 = vmatmul.mubr.f32.gmra.mrb[0].mxu0 %v364
        %v933 = vpop.f32.mrb[0].mxu0
        %v934 = vadd.f32 %v773, %v933
        %v935 = vpop.f32.mrb[0].mxu0
        %v936 = vadd.f32 %v775, %v935
        %937 = vmatprep.mubr.f32.mxu0 %v369
        %938 = vmatmul.mubr.f32.gmra.mrb[0].mxu0 %v368
        %v939 = vpop.f32.mrb[0].mxu0
        %v940 = vadd.f32 %v779, %v939
        %v941 = vpop.f32.mrb[0].mxu0
        %v942 = vadd.f32 %v781, %v941
        %943 = vmatprep.mubr.f32.mxu0 %v373
        %944 = vmatmul.mubr.f32.gmra.mrb[0].mxu0 %v372
        %v945 = vpop.f32.mrb[0].mxu0
        %v946 = vadd.f32 %v785, %v945
        %v947 = vpop.f32.mrb[0].mxu0
        %v948 = vadd.f32 %v787, %v947
        %949 = vmatprep.mubr.f32.mxu0 %v377
        %950 = vmatmul.mubr.f32.gmra.mrb[0].mxu0 %v376
        %v951 = vpop.f32.mrb[0].mxu0
        %v952 = vadd.f32 %v791, %v951
        %v953 = vpop.f32.mrb[0].mxu0
        %v954 = vadd.f32 %v793, %v953
        %955 = vdwg.mxu0
        %956 = vmatprep.subr.mxu0 %v381
        %957 = vmatpush1.msra.mxu0 %v380
        %958 = vmatprep.subr.mxu0 %v385
        %959 = vmatpush1.msra.mxu0 %v384
        %960 = vmatprep.subr.mxu0 %v389
        %961 = vmatpush1.msra.mxu0 %v388
        %962 = vmatprep.subr.mxu0 %v393
        %963 = vmatpush1.msra.mxu0 %v392
        %964 = vmatprep.subr.mxu0 %v397
        %965 = vmatpush1.msra.mxu0 %v396
        %966 = vmatprep.subr.mxu0 %v401
        %967 = vmatpush1.msra.mxu0 %v400
        %968 = vmatprep.subr.mxu0 %v405
        %969 = vmatpush1.msra.mxu0 %v404
        %970 = vmatprep.subr.mxu0 %v409
        %971 = vmatpush1.msra.mxu0 %v408
        %972 = vmatprep.subr.mxu0 %v413
        %973 = vmatpush1.msra.mxu0 %v412
        %974 = vmatprep.subr.mxu0 %v417
        %975 = vmatpush1.msra.mxu0 %v416
        %976 = vmatprep.subr.mxu0 %v421
        %977 = vmatpush1.msra.mxu0 %v420
        %978 = vmatprep.subr.mxu0 %v425
        %979 = vmatpush1.msra.mxu0 %v424
        %980 = vmatprep.subr.mxu0 %v429
        %981 = vmatpush1.msra.mxu0 %v428
        %982 = vmatprep.subr.mxu0 %v433
        %983 = vmatpush1.msra.mxu0 %v432
        %984 = vmatprep.subr.mxu0 %v437
        %985 = vmatpush1.msra.mxu0 %v436
        %986 = vmatprep.subr.mxu0 %v441
        %987 = vmatpush1.msra.mxu0 %v440
        %988 = vmatprep.subr.mxu0 %v445
        %989 = vmatpush1.msra.mxu0 %v444
        %990 = vmatprep.subr.mxu0 %v449
        %991 = vmatpush1.msra.mxu0 %v448
        %992 = vmatprep.subr.mxu0 %v453
        %993 = vmatpush1.msra.mxu0 %v452
        %994 = vmatprep.subr.mxu0 %v457
        %995 = vmatpush1.msra.mxu0 %v456
        %996 = vmatprep.subr.mxu0 %v461
        %997 = vmatpush1.msra.mxu0 %v460
        %998 = vmatprep.subr.mxu0 %v465
        %999 = vmatpush1.msra.mxu0 %v464
        %1000 = vmatprep.subr.mxu0 %v469
        %1001 = vmatpush1.msra.mxu0 %v468
        %1002 = vmatprep.subr.mxu0 %v473
        %1003 = vmatpush1.msra.mxu0 %v472
        %1004 = vmatprep.subr.mxu0 %v477
        %1005 = vmatpush1.msra.mxu0 %v476
        %1006 = vmatprep.subr.mxu0 %v481
        %1007 = vmatpush1.msra.mxu0 %v480
        %1008 = vmatprep.subr.mxu0 %v485
        %1009 = vmatpush1.msra.mxu0 %v484
        %1010 = vmatprep.subr.mxu0 %v489
        %1011 = vmatpush1.msra.mxu0 %v488
        %1012 = vmatprep.subr.mxu0 %v493
        %1013 = vmatpush1.msra.mxu0 %v492
        %1014 = vmatprep.subr.mxu0 %v497
        %1015 = vmatpush1.msra.mxu0 %v496
        %1016 = vmatprep.subr.mxu0 %v501
        %1017 = vmatpush1.msra.mxu0 %v500
        %1018 = vmatprep.subr.mxu0 %v505
        %1019 = vmatpush1.msra.mxu0 %v504
        %1020 = vmatprep.mubr.f32.mxu0 %v315
        %1021 = vmatmul.mubr.f32.gmra.mrb[0].mxu0 %v314
        %v1022 = vpop.f32.mrb[0].mxu0
        %v1023 = vadd.f32 0.0, %v1022
        %v1024 = vpop.f32.mrb[0].mxu0
        %v1025 = vadd.f32 0.0, %v1024
        %1026 = vmatprep.mubr.f32.mxu0 %v319
        %1027 = vmatmul.mubr.f32.gmra.mrb[0].mxu0 %v318
        %v1028 = vpop.f32.mrb[0].mxu0
        %v1029 = vadd.f32 0.0, %v1028
        %v1030 = vpop.f32.mrb[0].mxu0
        %v1031 = vadd.f32 0.0, %v1030
        %1032 = vmatprep.mubr.f32.mxu0 %v323
        %1033 = vmatmul.mubr.f32.gmra.mrb[0].mxu0 %v322
        %v1034 = vpop.f32.mrb[0].mxu0
        %v1035 = vadd.f32 0.0, %v1034
        %v1036 = vpop.f32.mrb[0].mxu0
        %v1037 = vadd.f32 0.0, %v1036
        %1038 = vmatprep.mubr.f32.mxu0 %v327
        %1039 = vmatmul.mubr.f32.gmra.mrb[0].mxu0 %v326
        %v1040 = vpop.f32.mrb[0].mxu0
        %v1041 = vadd.f32 0.0, %v1040
        %v1042 = vpop.f32.mrb[0].mxu0
        %v1043 = vadd.f32 0.0, %v1042
        %1044 = vmatprep.mubr.f32.mxu0 %v331
        %1045 = vmatmul.mubr.f32.gmra.mrb[0].mxu0 %v330
        %v1046 = vpop.f32.mrb[0].mxu0
        %v1047 = vadd.f32 0.0, %v1046
        %v1048 = vpop.f32.mrb[0].mxu0
        %v1049 = vadd.f32 0.0, %v1048
        %1050 = vmatprep.mubr.f32.mxu0 %v335
        %1051 = vmatmul.mubr.f32.gmra.mrb[0].mxu0 %v334
        %v1052 = vpop.f32.mrb[0].mxu0
        %v1053 = vadd.f32 0.0, %v1052
        %v1054 = vpop.f32.mrb[0].mxu0
        %v1055 = vadd.f32 0.0, %v1054
        %1056 = vmatprep.mubr.f32.mxu0 %v339
        %1057 = vmatmul.mubr.f32.gmra.mrb[0].mxu0 %v338
        %v1058 = vpop.f32.mrb[0].mxu0
        %v1059 = vadd.f32 0.0, %v1058
        %v1060 = vpop.f32.mrb[0].mxu0
        %v1061 = vadd.f32 0.0, %v1060
        %1062 = vmatprep.mubr.f32.mxu0 %v343
        %1063 = vmatmul.mubr.f32.gmra.mrb[0].mxu0 %v342
        %v1064 = vpop.f32.mrb[0].mxu0
        %v1065 = vadd.f32 0.0, %v1064
        %v1066 = vpop.f32.mrb[0].mxu0
        %v1067 = vadd.f32 0.0, %v1066
        %1068 = vmatprep.mubr.f32.mxu0 %v347
        %1069 = vmatmul.mubr.f32.gmra.mrb[0].mxu0 %v346
        %v1070 = vpop.f32.mrb[0].mxu0
        %v1071 = vadd.f32 0.0, %v1070
        %v1072 = vpop.f32.mrb[0].mxu0
        %v1073 = vadd.f32 0.0, %v1072
        %1074 = vmatprep.mubr.f32.mxu0 %v351
        %1075 = vmatmul.mubr.f32.gmra.mrb[0].mxu0 %v350
        %v1076 = vpop.f32.mrb[0].mxu0
        %v1077 = vadd.f32 0.0, %v1076
        %v1078 = vpop.f32.mrb[0].mxu0
        %v1079 = vadd.f32 0.0, %v1078
        %1080 = vmatprep.mubr.f32.mxu0 %v355
        %1081 = vmatmul.mubr.f32.gmra.mrb[0].mxu0 %v354
        %v1082 = vpop.f32.mrb[0].mxu0
        %v1083 = vadd.f32 0.0, %v1082
        %v1084 = vpop.f32.mrb[0].mxu0
        %v1085 = vadd.f32 0.0, %v1084
        %1086 = vmatprep.mubr.f32.mxu0 %v359
        %1087 = vmatmul.mubr.f32.gmra.mrb[0].mxu0 %v358
        %v1088 = vpop.f32.mrb[0].mxu0
        %v1089 = vadd.f32 0.0, %v1088
        %v1090 = vpop.f32.mrb[0].mxu0
        %v1091 = vadd.f32 0.0, %v1090
        %1092 = vmatprep.mubr.f32.mxu0 %v363
        %1093 = vmatmul.mubr.f32.gmra.mrb[0].mxu0 %v362
        %v1094 = vpop.f32.mrb[0].mxu0
        %v1095 = vadd.f32 0.0, %v1094
        %v1096 = vpop.f32.mrb[0].mxu0
        %v1097 = vadd.f32 0.0, %v1096
        %1098 = vmatprep.mubr.f32.mxu0 %v367
        %1099 = vmatmul.mubr.f32.gmra.mrb[0].mxu0 %v366
        %v1100 = vpop.f32.mrb[0].mxu0
        %v1101 = vadd.f32 0.0, %v1100
        %v1102 = vpop.f32.mrb[0].mxu0
        %v1103 = vadd.f32 0.0, %v1102
        %1104 = vmatprep.mubr.f32.mxu0 %v371
        %1105 = vmatmul.mubr.f32.gmra.mrb[0].mxu0 %v370
        %v1106 = vpop.f32.mrb[0].mxu0
        %v1107 = vadd.f32 0.0, %v1106
        %v1108 = vpop.f32.mrb[0].mxu0
        %v1109 = vadd.f32 0.0, %v1108
        %1110 = vmatprep.mubr.f32.mxu0 %v375
        %1111 = vmatmul.mubr.f32.gmra.mrb[0].mxu0 %v374
        %v1112 = vpop.f32.mrb[0].mxu0
        %v1113 = vadd.f32 0.0, %v1112
        %v1114 = vpop.f32.mrb[0].mxu0
        %v1115 = vadd.f32 0.0, %v1114
        %1116 = vdwg.mxu0
        %1117 = vmatprep.subr.mxu0 %v509
        %1118 = vmatpush1.msra.mxu0 %v508
        %1119 = vmatprep.subr.mxu0 %v513
        %1120 = vmatpush1.msra.mxu0 %v512
        %1121 = vmatprep.subr.mxu0 %v517
        %1122 = vmatpush1.msra.mxu0 %v516
        %1123 = vmatprep.subr.mxu0 %v521
        %1124 = vmatpush1.msra.mxu0 %v520
        %1125 = vmatprep.subr.mxu0 %v525
        %1126 = vmatpush1.msra.mxu0 %v524
        %1127 = vmatprep.subr.mxu0 %v529
        %1128 = vmatpush1.msra.mxu0 %v528
        %1129 = vmatprep.subr.mxu0 %v533
        %1130 = vmatpush1.msra.mxu0 %v532
        %1131 = vmatprep.subr.mxu0 %v537
        %1132 = vmatpush1.msra.mxu0 %v536
        %1133 = vmatprep.subr.mxu0 %v541
        %1134 = vmatpush1.msra.mxu0 %v540
        %1135 = vmatprep.subr.mxu0 %v545
        %1136 = vmatpush1.msra.mxu0 %v544
        %1137 = vmatprep.subr.mxu0 %v549
        %1138 = vmatpush1.msra.mxu0 %v548
        %1139 = vmatprep.subr.mxu0 %v553
        %1140 = vmatpush1.msra.mxu0 %v552
        %1141 = vmatprep.subr.mxu0 %v557
        %1142 = vmatpush1.msra.mxu0 %v556
        %1143 = vmatprep.subr.mxu0 %v561
        %1144 = vmatpush1.msra.mxu0 %v560
        %1145 = vmatprep.subr.mxu0 %v565
        %1146 = vmatpush1.msra.mxu0 %v564
        %1147 = vmatprep.subr.mxu0 %v569
        %1148 = vmatpush1.msra.mxu0 %v568
        %1149 = vmatprep.subr.mxu0 %v573
        %1150 = vmatpush1.msra.mxu0 %v572
        %1151 = vmatprep.subr.mxu0 %v577
        %1152 = vmatpush1.msra.mxu0 %v576
        %1153 = vmatprep.subr.mxu0 %v581
        %1154 = vmatpush1.msra.mxu0 %v580
        %1155 = vmatprep.subr.mxu0 %v585
        %1156 = vmatpush1.msra.mxu0 %v584
        %1157 = vmatprep.subr.mxu0 %v589
        %1158 = vmatpush1.msra.mxu0 %v588
        %1159 = vmatprep.subr.mxu0 %v593
        %1160 = vmatpush1.msra.mxu0 %v592
        %1161 = vmatprep.subr.mxu0 %v597
        %1162 = vmatpush1.msra.mxu0 %v596
        %1163 = vmatprep.subr.mxu0 %v601
        %1164 = vmatpush1.msra.mxu0 %v600
        %1165 = vmatprep.subr.mxu0 %v605
        %1166 = vmatpush1.msra.mxu0 %v604
        %1167 = vmatprep.subr.mxu0 %v609
        %1168 = vmatpush1.msra.mxu0 %v608
        %1169 = vmatprep.subr.mxu0 %v613
        %1170 = vmatpush1.msra.mxu0 %v612
        %1171 = vmatprep.subr.mxu0 %v617
        %1172 = vmatpush1.msra.mxu0 %v616
        %1173 = vmatprep.subr.mxu0 %v621
        %1174 = vmatpush1.msra.mxu0 %v620
        %1175 = vmatprep.subr.mxu0 %v625
        %1176 = vmatpush1.msra.mxu0 %v624
        %1177 = vmatprep.subr.mxu0 %v629
        %1178 = vmatpush1.msra.mxu0 %v628
        %1179 = vmatprep.subr.mxu0 %v633
        %1180 = vmatpush1.msra.mxu0 %v632
        %1181 = vmatprep.mubr.f32.mxu0 %v317
        %1182 = vmatmul.mubr.f32.gmra.mrb[0].mxu0 %v316
        %v1183 = vpop.f32.mrb[0].mxu0
        %v1184 = vadd.f32 %v1023, %v1183
        %v1185 = vpop.f32.mrb[0].mxu0
        %v1186 = vadd.f32 %v1025, %v1185
        %1187 = vmatprep.mubr.f32.mxu0 %v321
        %1188 = vmatmul.mubr.f32.gmra.mrb[0].mxu0 %v320
        %v1189 = vpop.f32.mrb[0].mxu0
        %v1190 = vadd.f32 %v1029, %v1189
        %v1191 = vpop.f32.mrb[0].mxu0
        %v1192 = vadd.f32 %v1031, %v1191
        %1193 = vmatprep.mubr.f32.mxu0 %v325
        %1194 = vmatmul.mubr.f32.gmra.mrb[0].mxu0 %v324
        %v1195 = vpop.f32.mrb[0].mxu0
        %v1196 = vadd.f32 %v1035, %v1195
        %v1197 = vpop.f32.mrb[0].mxu0
        %v1198 = vadd.f32 %v1037, %v1197
        %1199 = vmatprep.mubr.f32.mxu0 %v329
        %1200 = vmatmul.mubr.f32.gmra.mrb[0].mxu0 %v328
        %v1201 = vpop.f32.mrb[0].mxu0
        %v1202 = vadd.f32 %v1041, %v1201
        %v1203 = vpop.f32.mrb[0].mxu0
        %v1204 = vadd.f32 %v1043, %v1203
        %1205 = vmatprep.mubr.f32.mxu0 %v333
        %1206 = vmatmul.mubr.f32.gmra.mrb[0].mxu0 %v332
        %v1207 = vpop.f32.mrb[0].mxu0
        %v1208 = vadd.f32 %v1047, %v1207
        %v1209 = vpop.f32.mrb[0].mxu0
        %v1210 = vadd.f32 %v1049, %v1209
        %1211 = vmatprep.mubr.f32.mxu0 %v337
        %1212 = vmatmul.mubr.f32.gmra.mrb[0].mxu0 %v336
        %v1213 = vpop.f32.mrb[0].mxu0
        %v1214 = vadd.f32 %v1053, %v1213
        %v1215 = vpop.f32.mrb[0].mxu0
        %v1216 = vadd.f32 %v1055, %v1215
        %1217 = vmatprep.mubr.f32.mxu0 %v341
        %1218 = vmatmul.mubr.f32.gmra.mrb[0].mxu0 %v340
        %v1219 = vpop.f32.mrb[0].mxu0
        %v1220 = vadd.f32 %v1059, %v1219
        %v1221 = vpop.f32.mrb[0].mxu0
        %v1222 = vadd.f32 %v1061, %v1221
        %1223 = vmatprep.mubr.f32.mxu0 %v345
        %1224 = vmatmul.mubr.f32.gmra.mrb[0].mxu0 %v344
        %v1225 = vpop.f32.mrb[0].mxu0
        %v1226 = vadd.f32 %v1065, %v1225
        %v1227 = vpop.f32.mrb[0].mxu0
        %v1228 = vadd.f32 %v1067, %v1227
        %1229 = vmatprep.mubr.f32.mxu0 %v349
        %1230 = vmatmul.mubr.f32.gmra.mrb[0].mxu0 %v348
        %v1231 = vpop.f32.mrb[0].mxu0
        %v1232 = vadd.f32 %v1071, %v1231
        %v1233 = vpop.f32.mrb[0].mxu0
        %v1234 = vadd.f32 %v1073, %v1233
        %1235 = vmatprep.mubr.f32.mxu0 %v353
        %1236 = vmatmul.mubr.f32.gmra.mrb[0].mxu0 %v352
        %v1237 = vpop.f32.mrb[0].mxu0
        %v1238 = vadd.f32 %v1077, %v1237
        %v1239 = vpop.f32.mrb[0].mxu0
        %v1240 = vadd.f32 %v1079, %v1239
        %1241 = vmatprep.mubr.f32.mxu0 %v357
        %1242 = vmatmul.mubr.f32.gmra.mrb[0].mxu0 %v356
        %v1243 = vpop.f32.mrb[0].mxu0
        %v1244 = vadd.f32 %v1083, %v1243
        %v1245 = vpop.f32.mrb[0].mxu0
        %v1246 = vadd.f32 %v1085, %v1245
        %1247 = vmatprep.mubr.f32.mxu0 %v361
        %1248 = vmatmul.mubr.f32.gmra.mrb[0].mxu0 %v360
        %v1249 = vpop.f32.mrb[0].mxu0
        %v1250 = vadd.f32 %v1089, %v1249
        %v1251 = vpop.f32.mrb[0].mxu0
        %v1252 = vadd.f32 %v1091, %v1251
        %1253 = vmatprep.mubr.f32.mxu0 %v365
        %1254 = vmatmul.mubr.f32.gmra.mrb[0].mxu0 %v364
        %v1255 = vpop.f32.mrb[0].mxu0
        %v1256 = vadd.f32 %v1095, %v1255
        %v1257 = vpop.f32.mrb[0].mxu0
        %v1258 = vadd.f32 %v1097, %v1257
        %1259 = vmatprep.mubr.f32.mxu0 %v369
        %1260 = vmatmul.mubr.f32.gmra.mrb[0].mxu0 %v368
        %v1261 = vpop.f32.mrb[0].mxu0
        %v1262 = vadd.f32 %v1101, %v1261
        %v1263 = vpop.f32.mrb[0].mxu0
        %v1264 = vadd.f32 %v1103, %v1263
        %1265 = vmatprep.mubr.f32.mxu0 %v373
        %1266 = vmatmul.mubr.f32.gmra.mrb[0].mxu0 %v372
        %v1267 = vpop.f32.mrb[0].mxu0
        %v1268 = vadd.f32 %v1107, %v1267
        %v1269 = vpop.f32.mrb[0].mxu0
        %v1270 = vadd.f32 %v1109, %v1269
        %1271 = vmatprep.mubr.f32.mxu0 %v377
        %1272 = vmatmul.mubr.f32.gmra.mrb[0].mxu0 %v376
        %v1273 = vpop.f32.mrb[0].mxu0
        %v1274 = vadd.f32 %v1113, %v1273
        %v1275 = vpop.f32.mrb[0].mxu0
        %v1276 = vadd.f32 %v1115, %v1275
        %1277 = vdwg.mxu0
        %p1278 = scmp.eq.s32.totalorder %s28, 0
        // Predicated region
        $region57: #{tpu_custom_call.1} parent=43 // pred_check
          %p1279 = pneg %p1278
        $region58: #{tpu_custom_call.1} parent=43 // pred_check_branch
          %1281 = sbr.rel (%p1279) target = $region60
        $region59: #{tpu_custom_call.1} parent=43 // pred_region
          %p1282 = scmp.eq.s32.totalorder %s29, 0
          // Predicated region
          $region61: #{tpu_custom_call.1} parent=59 // pred_check
            %p1283 = pneg %p1282
          $region62: #{tpu_custom_call.1} parent=59 // pred_check_branch
            %1285 = sbr.rel (%p1283) target = $region64
          $region63: #{tpu_custom_call.1} parent=59 // pred_region
            %v1286 = vlaneseq
            %vm1287 = vcmp.ge.s32.totalorder %v1286, 0
            %vm1288 = vcmp.lt.s32.totalorder %v1286, 512
            %vm1289 = vmand %vm1287, %vm1288
            %1290 = vst.msk [vmem:[#allocation2] sm:$0xf] %vm1289, 0.0
            %1291 = vst.msk [vmem:[#allocation3] sm:$0xf] %vm1289, 0.0
          $region64: #{tpu_custom_call.1} parent=59 // pred_fallthru
            _
          %v1292 = vld [vmem:[#allocation2] sm:$0xf]
          %v1293 = vadd.f32 %v862, %v868
          %v1294 = vadd.f32 %v1293, %v874
          %v1295 = vadd.f32 %v1294, %v880
          %v1296 = vadd.f32 %v1295, %v886
          %v1297 = vadd.f32 %v1296, %v892
          %v1298 = vadd.f32 %v1297, %v898
          %v1299 = vadd.f32 %v1298, %v904
          %v1300 = vadd.f32 %v1299, %v910
          %v1301 = vadd.f32 %v1300, %v916
          %v1302 = vadd.f32 %v1301, %v922
          %v1303 = vadd.f32 %v1302, %v928
          %v1304 = vadd.f32 %v1303, %v934
          %v1305 = vadd.f32 %v1304, %v940
          %v1306 = vadd.f32 %v1305, %v946
          %v1307 = vadd.f32 %v1306, %v952
          %v1308 = vrot.slane %v1307, 4
          %v1309 = vadd.f32 %v1307, %v1308
          %v1310 = vrot.slane %v1309, 2
          %v1311 = vadd.f32 %v1309, %v1310
          %v1312 = vrot.slane %v1311, 1
          %v1313 = vadd.f32 %v1311, %v1312
          %v1314 = vadd.f32 %v864, %v870
          %v1315 = vadd.f32 %v1314, %v876
          %v1316 = vadd.f32 %v1315, %v882
          %v1317 = vadd.f32 %v1316, %v888
          %v1318 = vadd.f32 %v1317, %v894
          %v1319 = vadd.f32 %v1318, %v900
          %v1320 = vadd.f32 %v1319, %v906
          %v1321 = vadd.f32 %v1320, %v912
          %v1322 = vadd.f32 %v1321, %v918
          %v1323 = vadd.f32 %v1322, %v924
          %v1324 = vadd.f32 %v1323, %v930
          %v1325 = vadd.f32 %v1324, %v936
          %v1326 = vadd.f32 %v1325, %v942
          %v1327 = vadd.f32 %v1326, %v948
          %v1328 = vadd.f32 %v1327, %v954
          %v1329 = vrot.slane %v1328, 4
          %v1330 = vadd.f32 %v1328, %v1329
          %v1331 = vrot.slane %v1330, 2
          %v1332 = vadd.f32 %v1330, %v1331
          %v1333 = vrot.slane %v1332, 1
          %v1334 = vadd.f32 %v1332, %v1333
          %v1335 = vadd.f32 %v1184, %v1190
          %v1336 = vadd.f32 %v1335, %v1196
          %v1337 = vadd.f32 %v1336, %v1202
          %v1338 = vadd.f32 %v1337, %v1208
          %v1339 = vadd.f32 %v1338, %v1214
          %v1340 = vadd.f32 %v1339, %v1220
          %v1341 = vadd.f32 %v1340, %v1226
          %v1342 = vadd.f32 %v1341, %v1232
          %v1343 = vadd.f32 %v1342, %v1238
          %v1344 = vadd.f32 %v1343, %v1244
          %v1345 = vadd.f32 %v1344, %v1250
          %v1346 = vadd.f32 %v1345, %v1256
          %v1347 = vadd.f32 %v1346, %v1262
          %v1348 = vadd.f32 %v1347, %v1268
          %v1349 = vadd.f32 %v1348, %v1274
          %v1350 = vrot.slane %v1349, 4
          %v1351 = vadd.f32 %v1349, %v1350
          %v1352 = vrot.slane %v1351, 2
          %v1353 = vadd.f32 %v1351, %v1352
          %v1354 = vrot.slane %v1353, 1
          %v1355 = vadd.f32 %v1353, %v1354
          %v1356 = vadd.f32 %v1186, %v1192
          %v1357 = vadd.f32 %v1356, %v1198
          %v1358 = vadd.f32 %v1357, %v1204
          %v1359 = vadd.f32 %v1358, %v1210
          %v1360 = vadd.f32 %v1359, %v1216
          %v1361 = vadd.f32 %v1360, %v1222
          %v1362 = vadd.f32 %v1361, %v1228
          %v1363 = vadd.f32 %v1362, %v1234
          %v1364 = vadd.f32 %v1363, %v1240
          %v1365 = vadd.f32 %v1364, %v1246
          %v1366 = vadd.f32 %v1365, %v1252
          %v1367 = vadd.f32 %v1366, %v1258
          %v1368 = vadd.f32 %v1367, %v1264
          %v1369 = vadd.f32 %v1368, %v1270
          %v1370 = vadd.f32 %v1369, %v1276
          %v1371 = vrot.slane %v1370, 4
          %v1372 = vadd.f32 %v1370, %v1371
          %v1373 = vrot.slane %v1372, 2
          %v1374 = vadd.f32 %v1372, %v1373
          %v1375 = vrot.slane %v1374, 1
          %v1376 = vadd.f32 %v1374, %v1375
          %v1381 = vcombine.low %v1313, %v1334
          %v1382 = vcombine.low %v1355, %v1376
          %v1384 = vunpack.c.l.s4 1966171168
          %v1385 = vunpack.c.0.s8 %v1384
          %v1386 = vlaneseq
          %v1387 = vshrl.u32 %v1386, 7
          %v1388 = vsub.s32 %v1385, %v1387
          %v1389 = vrot.slane %v1381, %v1388
          %v1391 = vunpack.c.l.s4 1966171168
          %v1392 = vunpack.c.0.s8 %v1391
          %v1393 = vlaneseq
          %v1394 = vshrl.u32 %v1393, 7
          %v1395 = vsub.s32 %v1392, %v1394
          %v1396 = vrot.slane %v1382, %v1395
          %v1397 = vcombine.low %v1389, %v1396
          %v1399 = vunpack.c.l.s4 1966171168
          %v1400 = vunpack.c.0.s8 %v1399
          %v1401 = vlaneseq
          %v1402 = vshrl.u32 %v1401, 7
          %v1403 = vsub.s32 %v1400, %v1402
          %v1404 = vrot.slane %v1397, %v1403
          %v1406 = vadd.f32 %v1292, %v1404
          %v1407 = vlaneseq
          %vm1408 = vcmp.ge.s32.totalorder %v1407, 0
          %vm1409 = vcmp.lt.s32.totalorder %v1407, 512
          %vm1410 = vmand %vm1408, %vm1409
          %1411 = vst.msk [vmem:[#allocation2] sm:$0xf] %vm1410, %v1406
          %v1412 = vld [vmem:[#allocation3] sm:$0xf]
          %v1413 = vmul.f32 %v862, %v862
          %v1414 = vmul.f32 %v864, %v864
          %v1415 = vmul.f32 %v1184, %v1184
          %v1416 = vmul.f32 %v1186, %v1186
          %v1417 = vmul.f32 %v868, %v868
          %v1418 = vmul.f32 %v870, %v870
          %v1419 = vmul.f32 %v1190, %v1190
          %v1420 = vmul.f32 %v1192, %v1192
          %v1421 = vmul.f32 %v874, %v874
          %v1422 = vmul.f32 %v876, %v876
          %v1423 = vmul.f32 %v1196, %v1196
          %v1424 = vmul.f32 %v1198, %v1198
          %v1425 = vmul.f32 %v880, %v880
          %v1426 = vmul.f32 %v882, %v882
          %v1427 = vmul.f32 %v1202, %v1202
          %v1428 = vmul.f32 %v1204, %v1204
          %v1429 = vmul.f32 %v886, %v886
          %v1430 = vmul.f32 %v888, %v888
          %v1431 = vmul.f32 %v1208, %v1208
          %v1432 = vmul.f32 %v1210, %v1210
          %v1433 = vmul.f32 %v892, %v892
          %v1434 = vmul.f32 %v894, %v894
          %v1435 = vmul.f32 %v1214, %v1214
          %v1436 = vmul.f32 %v1216, %v1216
          %v1437 = vmul.f32 %v898, %v898
          %v1438 = vmul.f32 %v900, %v900
          %v1439 = vmul.f32 %v1220, %v1220
          %v1440 = vmul.f32 %v1222, %v1222
          %v1441 = vmul.f32 %v904, %v904
          %v1442 = vmul.f32 %v906, %v906
          %v1443 = vmul.f32 %v1226, %v1226
          %v1444 = vmul.f32 %v1228, %v1228
          %v1445 = vmul.f32 %v910, %v910
          %v1446 = vmul.f32 %v912, %v912
          %v1447 = vmul.f32 %v1232, %v1232
          %v1448 = vmul.f32 %v1234, %v1234
          %v1449 = vmul.f32 %v916, %v916
          %v1450 = vmul.f32 %v918, %v918
          %v1451 = vmul.f32 %v1238, %v1238
          %v1452 = vmul.f32 %v1240, %v1240
          %v1453 = vmul.f32 %v922, %v922
          %v1454 = vmul.f32 %v924, %v924
          %v1455 = vmul.f32 %v1244, %v1244
          %v1456 = vmul.f32 %v1246, %v1246
          %v1457 = vmul.f32 %v928, %v928
          %v1458 = vmul.f32 %v930, %v930
          %v1459 = vmul.f32 %v1250, %v1250
          %v1460 = vmul.f32 %v1252, %v1252
          %v1461 = vmul.f32 %v934, %v934
          %v1462 = vmul.f32 %v936, %v936
          %v1463 = vmul.f32 %v1256, %v1256
          %v1464 = vmul.f32 %v1258, %v1258
          %v1465 = vmul.f32 %v940, %v940
          %v1466 = vmul.f32 %v942, %v942
          %v1467 = vmul.f32 %v1262, %v1262
          %v1468 = vmul.f32 %v1264, %v1264
          %v1469 = vmul.f32 %v946, %v946
          %v1470 = vmul.f32 %v948, %v948
          %v1471 = vmul.f32 %v1268, %v1268
          %v1472 = vmul.f32 %v1270, %v1270
          %v1473 = vmul.f32 %v952, %v952
          %v1474 = vmul.f32 %v954, %v954
          %v1475 = vmul.f32 %v1274, %v1274
          %v1476 = vmul.f32 %v1276, %v1276
          %v1477 = vadd.f32 %v1413, %v1417
          %v1478 = vadd.f32 %v1477, %v1421
          %v1479 = vadd.f32 %v1478, %v1425
          %v1480 = vadd.f32 %v1479, %v1429
          %v1481 = vadd.f32 %v1480, %v1433
          %v1482 = vadd.f32 %v1481, %v1437
          %v1483 = vadd.f32 %v1482, %v1441
          %v1484 = vadd.f32 %v1483, %v1445
          %v1485 = vadd.f32 %v1484, %v1449
          %v1486 = vadd.f32 %v1485, %v1453
          %v1487 = vadd.f32 %v1486, %v1457
          %v1488 = vadd.f32 %v1487, %v1461
          %v1489 = vadd.f32 %v1488, %v1465
          %v1490 = vadd.f32 %v1489, %v1469
          %v1491 = vadd.f32 %v1490, %v1473
          %v1492 = vrot.slane %v1491, 4
          %v1493 = vadd.f32 %v1491, %v1492
          %v1494 = vrot.slane %v1493, 2
          %v1495 = vadd.f32 %v1493, %v1494
          %v1496 = vrot.slane %v1495, 1
          %v1497 = vadd.f32 %v1495, %v1496
          %v1498 = vadd.f32 %v1414, %v1418
          %v1499 = vadd.f32 %v1498, %v1422
          %v1500 = vadd.f32 %v1499, %v1426
          %v1501 = vadd.f32 %v1500, %v1430
          %v1502 = vadd.f32 %v1501, %v1434
          %v1503 = vadd.f32 %v1502, %v1438
          %v1504 = vadd.f32 %v1503, %v1442
          %v1505 = vadd.f32 %v1504, %v1446
          %v1506 = vadd.f32 %v1505, %v1450
          %v1507 = vadd.f32 %v1506, %v1454
          %v1508 = vadd.f32 %v1507, %v1458
          %v1509 = vadd.f32 %v1508, %v1462
          %v1510 = vadd.f32 %v1509, %v1466
          %v1511 = vadd.f32 %v1510, %v1470
          %v1512 = vadd.f32 %v1511, %v1474
          %v1513 = vrot.slane %v1512, 4
          %v1514 = vadd.f32 %v1512, %v1513
          %v1515 = vrot.slane %v1514, 2
          %v1516 = vadd.f32 %v1514, %v1515
          %v1517 = vrot.slane %v1516, 1
          %v1518 = vadd.f32 %v1516, %v1517
          %v1519 = vadd.f32 %v1415, %v1419
          %v1520 = vadd.f32 %v1519, %v1423
          %v1521 = vadd.f32 %v1520, %v1427
          %v1522 = vadd.f32 %v1521, %v1431
          %v1523 = vadd.f32 %v1522, %v1435
          %v1524 = vadd.f32 %v1523, %v1439
          %v1525 = vadd.f32 %v1524, %v1443
          %v1526 = vadd.f32 %v1525, %v1447
          %v1527 = vadd.f32 %v1526, %v1451
          %v1528 = vadd.f32 %v1527, %v1455
          %v1529 = vadd.f32 %v1528, %v1459
          %v1530 = vadd.f32 %v1529, %v1463
          %v1531 = vadd.f32 %v1530, %v1467
          %v1532 = vadd.f32 %v1531, %v1471
          %v1533 = vadd.f32 %v1532, %v1475
          %v1534 = vrot.slane %v1533, 4
          %v1535 = vadd.f32 %v1533, %v1534
          %v1536 = vrot.slane %v1535, 2
          %v1537 = vadd.f32 %v1535, %v1536
          %v1538 = vrot.slane %v1537, 1
          %v1539 = vadd.f32 %v1537, %v1538
          %v1540 = vadd.f32 %v1416, %v1420
          %v1541 = vadd.f32 %v1540, %v1424
          %v1542 = vadd.f32 %v1541, %v1428
          %v1543 = vadd.f32 %v1542, %v1432
          %v1544 = vadd.f32 %v1543, %v1436
          %v1545 = vadd.f32 %v1544, %v1440
          %v1546 = vadd.f32 %v1545, %v1444
          %v1547 = vadd.f32 %v1546, %v1448
          %v1548 = vadd.f32 %v1547, %v1452
          %v1549 = vadd.f32 %v1548, %v1456
          %v1550 = vadd.f32 %v1549, %v1460
          %v1551 = vadd.f32 %v1550, %v1464
          %v1552 = vadd.f32 %v1551, %v1468
          %v1553 = vadd.f32 %v1552, %v1472
          %v1554 = vadd.f32 %v1553, %v1476
          %v1555 = vrot.slane %v1554, 4
          %v1556 = vadd.f32 %v1554, %v1555
          %v1557 = vrot.slane %v1556, 2
          %v1558 = vadd.f32 %v1556, %v1557
          %v1559 = vrot.slane %v1558, 1
          %v1560 = vadd.f32 %v1558, %v1559
          %v1565 = vcombine.low %v1497, %v1518
          %v1566 = vcombine.low %v1539, %v1560
          %v1568 = vunpack.c.l.s4 1966171168
          %v1569 = vunpack.c.0.s8 %v1568
          %v1570 = vlaneseq
          %v1571 = vshrl.u32 %v1570, 7
          %v1572 = vsub.s32 %v1569, %v1571
          %v1573 = vrot.slane %v1565, %v1572
          %v1575 = vunpack.c.l.s4 1966171168
          %v1576 = vunpack.c.0.s8 %v1575
          %v1577 = vlaneseq
          %v1578 = vshrl.u32 %v1577, 7
          %v1579 = vsub.s32 %v1576, %v1578
          %v1580 = vrot.slane %v1566, %v1579
          %v1581 = vcombine.low %v1573, %v1580
          %v1583 = vunpack.c.l.s4 1966171168
          %v1584 = vunpack.c.0.s8 %v1583
          %v1585 = vlaneseq
          %v1586 = vshrl.u32 %v1585, 7
          %v1587 = vsub.s32 %v1584, %v1586
          %v1588 = vrot.slane %v1581, %v1587
          %v1590 = vadd.f32 %v1412, %v1588
          %1591 = vst.msk [vmem:[#allocation3] sm:$0xf] %vm1410, %v1590
          %p1592 = scmp.eq.s32.totalorder %s29, 1
          // Predicated region
          $region65: #{tpu_custom_call.1} parent=59 // pred_check
            %p1593 = pneg %p1592
          $region66: #{tpu_custom_call.1} parent=59 // pred_check_branch
            %1595 = sbr.rel (%p1593) target = $region68
          $region67: #{tpu_custom_call.1} parent=59 // pred_region
            %v1596 = vld [vmem:[#allocation2] sm:$0xf]
            %v1597 = vmul.f32 %v1596, 0.005
            %v1598 = vld [vmem:[#allocation3] sm:$0xf]
            %v1599 = vmul.f32 %v1598, 0.005
            %v1600 = vmul.f32 %v1597, %v1597
            %v1601 = vsub.f32 %v1599, %v1600
            %v1602 = vmax.f32 %v1601, 0.0
            %v1603 = vld [vmem:[%s2] sm:$0xf]
            %v1604 = vadd.f32 %v1602, 1e-05
            %v1605 = vrsqrt.pop %v1604
            %v1606 = vmul.f32 %v1603, %v1605
            %1607 = vst.msk [vmem:[#allocation4] sm:$0xf] %vm1410, %v1606
            %v1608 = vld [vmem:[%s3] sm:$0xf]
            %v1609 = vmul.f32 %v1597, %v1606
            %v1610 = vsub.f32 %v1608, %v1609
            %1611 = vst.msk [vmem:[#allocation5] sm:$0xf] %vm1410, %v1610
          $region68: #{tpu_custom_call.1} parent=59 // pred_fallthru
            _
          %1612 = vst [vmem:[%s311] sm:$0xff] 0.0
          %1613 = vst [vmem:[%s311 + $0x8] sm:$0xff] 0.0
          %1614 = vst [vmem:[%s311 + $0x10] sm:$0xff] 0.0
          %1615 = vst [vmem:[%s311 + $0x18] sm:$0xff] 0.0
          %1616 = vst [vmem:[%s311 + $0x20] sm:$0xff] 0.0
          %1617 = vst [vmem:[%s311 + $0x28] sm:$0xff] 0.0
          %1618 = vst [vmem:[%s311 + $0x30] sm:$0xff] 0.0
          %1619 = vst [vmem:[%s311 + $0x38] sm:$0xff] 0.0
          %1620 = vst [vmem:[%s311 + $0x40] sm:$0xff] 0.0
          %1621 = vst [vmem:[%s311 + $0x48] sm:$0xff] 0.0
          %1622 = vst [vmem:[%s311 + $0x50] sm:$0xff] 0.0
          %1623 = vst [vmem:[%s311 + $0x58] sm:$0xff] 0.0
          %1624 = vst [vmem:[%s311 + $0x60] sm:$0xff] 0.0
          %1625 = vst [vmem:[%s311 + $0x68] sm:$0xff] 0.0
          %1626 = vst [vmem:[%s311 + $0x70] sm:$0xff] 0.0
          %1627 = vst [vmem:[%s311 + $0x78] sm:$0xff] 0.0
        $region60: #{tpu_custom_call.1} parent=43 // pred_fallthru
          _
        %p1628 = scmp.eq.s32.totalorder %s28, 1
        // Predicated region
        $region69: #{tpu_custom_call.1} parent=43 // pred_check
          %p1629 = pneg %p1628
        $region70: #{tpu_custom_call.1} parent=43 // pred_check_branch
          %1631 = sbr.rel (%p1629) target = $region72
        $region71: #{tpu_custom_call.1} parent=43 // pred_region
          %v1632 = vld [vmem:[#allocation4] sm:$0xf]
          %v1634 = vlaneseq
          %v1635 = vshrl.u32 %v1634, 7
          %v1636 = vsub.s32 0, %v1635
          %v1637 = vrot.slane %v1632, %v1636
          %v1638 = vlaneseq
          %v1639 = vshrl.u32 %v1638, 7
          %v1640 = vsub.s32 1, %v1639
          %v1641 = vrot.slane %v1632, %v1640
          %v1642 = vlaneseq
          %v1643 = vshrl.u32 %v1642, 7
          %v1644 = vsub.s32 2, %v1643
          %v1645 = vrot.slane %v1632, %v1644
          %v1646 = vlaneseq
          %v1647 = vshrl.u32 %v1646, 7
          %v1648 = vsub.s32 3, %v1647
          %v1649 = vrot.slane %v1632, %v1648
          %v1654 = vmul.f32 %v862, %v1637
          %v1655 = vmul.f32 %v864, %v1641
          %v1656 = vmul.f32 %v1184, %v1645
          %v1657 = vmul.f32 %v1186, %v1649
          %v1658 = vmul.f32 %v868, %v1637
          %v1659 = vmul.f32 %v870, %v1641
          %v1660 = vmul.f32 %v1190, %v1645
          %v1661 = vmul.f32 %v1192, %v1649
          %v1662 = vmul.f32 %v874, %v1637
          %v1663 = vmul.f32 %v876, %v1641
          %v1664 = vmul.f32 %v1196, %v1645
          %v1665 = vmul.f32 %v1198, %v1649
          %v1666 = vmul.f32 %v880, %v1637
          %v1667 = vmul.f32 %v882, %v1641
          %v1668 = vmul.f32 %v1202, %v1645
          %v1669 = vmul.f32 %v1204, %v1649
          %v1670 = vmul.f32 %v886, %v1637
          %v1671 = vmul.f32 %v888, %v1641
          %v1672 = vmul.f32 %v1208, %v1645
          %v1673 = vmul.f32 %v1210, %v1649
          %v1674 = vmul.f32 %v892, %v1637
          %v1675 = vmul.f32 %v894, %v1641
          %v1676 = vmul.f32 %v1214, %v1645
          %v1677 = vmul.f32 %v1216, %v1649
          %v1678 = vmul.f32 %v898, %v1637
          %v1679 = vmul.f32 %v900, %v1641
          %v1680 = vmul.f32 %v1220, %v1645
          %v1681 = vmul.f32 %v1222, %v1649
          %v1682 = vmul.f32 %v904, %v1637
          %v1683 = vmul.f32 %v906, %v1641
          %v1684 = vmul.f32 %v1226, %v1645
          %v1685 = vmul.f32 %v1228, %v1649
          %v1686 = vmul.f32 %v910, %v1637
          %v1687 = vmul.f32 %v912, %v1641
          %v1688 = vmul.f32 %v1232, %v1645
          %v1689 = vmul.f32 %v1234, %v1649
          %v1690 = vmul.f32 %v916, %v1637
          %v1691 = vmul.f32 %v918, %v1641
          %v1692 = vmul.f32 %v1238, %v1645
          %v1693 = vmul.f32 %v1240, %v1649
          %v1694 = vmul.f32 %v922, %v1637
          %v1695 = vmul.f32 %v924, %v1641
          %v1696 = vmul.f32 %v1244, %v1645
          %v1697 = vmul.f32 %v1246, %v1649
          %v1698 = vmul.f32 %v928, %v1637
          %v1699 = vmul.f32 %v930, %v1641
          %v1700 = vmul.f32 %v1250, %v1645
          %v1701 = vmul.f32 %v1252, %v1649
          %v1702 = vmul.f32 %v934, %v1637
          %v1703 = vmul.f32 %v936, %v1641
          %v1704 = vmul.f32 %v1256, %v1645
          %v1705 = vmul.f32 %v1258, %v1649
          %v1706 = vmul.f32 %v940, %v1637
          %v1707 = vmul.f32 %v942, %v1641
          %v1708 = vmul.f32 %v1262, %v1645
          %v1709 = vmul.f32 %v1264, %v1649
          %v1710 = vmul.f32 %v946, %v1637
          %v1711 = vmul.f32 %v948, %v1641
          %v1712 = vmul.f32 %v1268, %v1645
          %v1713 = vmul.f32 %v1270, %v1649
          %v1714 = vmul.f32 %v952, %v1637
          %v1715 = vmul.f32 %v954, %v1641
          %v1716 = vmul.f32 %v1274, %v1645
          %v1717 = vmul.f32 %v1276, %v1649
          %v1718 = vld [vmem:[#allocation5] sm:$0xf]
          %v1720 = vlaneseq
          %v1721 = vshrl.u32 %v1720, 7
          %v1722 = vsub.s32 0, %v1721
          %v1723 = vrot.slane %v1718, %v1722
          %v1724 = vlaneseq
          %v1725 = vshrl.u32 %v1724, 7
          %v1726 = vsub.s32 1, %v1725
          %v1727 = vrot.slane %v1718, %v1726
          %v1728 = vlaneseq
          %v1729 = vshrl.u32 %v1728, 7
          %v1730 = vsub.s32 2, %v1729
          %v1731 = vrot.slane %v1718, %v1730
          %v1732 = vlaneseq
          %v1733 = vshrl.u32 %v1732, 7
          %v1734 = vsub.s32 3, %v1733
          %v1735 = vrot.slane %v1718, %v1734
          %v1740 = vadd.f32 %v1654, %v1723
          %v1741 = vadd.f32 %v1655, %v1727
          %v1742 = vadd.f32 %v1656, %v1731
          %v1743 = vadd.f32 %v1657, %v1735
          %v1744 = vadd.f32 %v1658, %v1723
          %v1745 = vadd.f32 %v1659, %v1727
          %v1746 = vadd.f32 %v1660, %v1731
          %v1747 = vadd.f32 %v1661, %v1735
          %v1748 = vadd.f32 %v1662, %v1723
          %v1749 = vadd.f32 %v1663, %v1727
          %v1750 = vadd.f32 %v1664, %v1731
          %v1751 = vadd.f32 %v1665, %v1735
          %v1752 = vadd.f32 %v1666, %v1723
          %v1753 = vadd.f32 %v1667, %v1727
          %v1754 = vadd.f32 %v1668, %v1731
          %v1755 = vadd.f32 %v1669, %v1735
          %v1756 = vadd.f32 %v1670, %v1723
          %v1757 = vadd.f32 %v1671, %v1727
          %v1758 = vadd.f32 %v1672, %v1731
          %v1759 = vadd.f32 %v1673, %v1735
          %v1760 = vadd.f32 %v1674, %v1723
          %v1761 = vadd.f32 %v1675, %v1727
          %v1762 = vadd.f32 %v1676, %v1731
          %v1763 = vadd.f32 %v1677, %v1735
          %v1764 = vadd.f32 %v1678, %v1723
          %v1765 = vadd.f32 %v1679, %v1727
          %v1766 = vadd.f32 %v1680, %v1731
          %v1767 = vadd.f32 %v1681, %v1735
          %v1768 = vadd.f32 %v1682, %v1723
          %v1769 = vadd.f32 %v1683, %v1727
          %v1770 = vadd.f32 %v1684, %v1731
          %v1771 = vadd.f32 %v1685, %v1735
          %v1772 = vadd.f32 %v1686, %v1723
          %v1773 = vadd.f32 %v1687, %v1727
          %v1774 = vadd.f32 %v1688, %v1731
          %v1775 = vadd.f32 %v1689, %v1735
          %v1776 = vadd.f32 %v1690, %v1723
          %v1777 = vadd.f32 %v1691, %v1727
          %v1778 = vadd.f32 %v1692, %v1731
          %v1779 = vadd.f32 %v1693, %v1735
          %v1780 = vadd.f32 %v1694, %v1723
          %v1781 = vadd.f32 %v1695, %v1727
          %v1782 = vadd.f32 %v1696, %v1731
          %v1783 = vadd.f32 %v1697, %v1735
          %v1784 = vadd.f32 %v1698, %v1723
          %v1785 = vadd.f32 %v1699, %v1727
          %v1786 = vadd.f32 %v1700, %v1731
          %v1787 = vadd.f32 %v1701, %v1735
          %v1788 = vadd.f32 %v1702, %v1723
          %v1789 = vadd.f32 %v1703, %v1727
          %v1790 = vadd.f32 %v1704, %v1731
          %v1791 = vadd.f32 %v1705, %v1735
          %v1792 = vadd.f32 %v1706, %v1723
          %v1793 = vadd.f32 %v1707, %v1727
          %v1794 = vadd.f32 %v1708, %v1731
          %v1795 = vadd.f32 %v1709, %v1735
          %v1796 = vadd.f32 %v1710, %v1723
          %v1797 = vadd.f32 %v1711, %v1727
          %v1798 = vadd.f32 %v1712, %v1731
          %v1799 = vadd.f32 %v1713, %v1735
          %v1800 = vadd.f32 %v1714, %v1723
          %v1801 = vadd.f32 %v1715, %v1727
          %v1802 = vadd.f32 %v1716, %v1731
          %v1803 = vadd.f32 %v1717, %v1735
          %v1804 = vmax.f32 %v1740, 0.0
          %v1805 = vmax.f32 %v1741, 0.0
          %v1806 = vmax.f32 %v1742, 0.0
          %v1807 = vmax.f32 %v1743, 0.0
          %v1808 = vmax.f32 %v1744, 0.0
          %v1809 = vmax.f32 %v1745, 0.0
          %v1810 = vmax.f32 %v1746, 0.0
          %v1811 = vmax.f32 %v1747, 0.0
          %v1812 = vmax.f32 %v1748, 0.0
          %v1813 = vmax.f32 %v1749, 0.0
          %v1814 = vmax.f32 %v1750, 0.0
          %v1815 = vmax.f32 %v1751, 0.0
          %v1816 = vmax.f32 %v1752, 0.0
          %v1817 = vmax.f32 %v1753, 0.0
          %v1818 = vmax.f32 %v1754, 0.0
          %v1819 = vmax.f32 %v1755, 0.0
          %v1820 = vmax.f32 %v1756, 0.0
          %v1821 = vmax.f32 %v1757, 0.0
          %v1822 = vmax.f32 %v1758, 0.0
          %v1823 = vmax.f32 %v1759, 0.0
          %v1824 = vmax.f32 %v1760, 0.0
          %v1825 = vmax.f32 %v1761, 0.0
          %v1826 = vmax.f32 %v1762, 0.0
          %v1827 = vmax.f32 %v1763, 0.0
          %v1828 = vmax.f32 %v1764, 0.0
          %v1829 = vmax.f32 %v1765, 0.0
          %v1830 = vmax.f32 %v1766, 0.0
          %v1831 = vmax.f32 %v1767, 0.0
          %v1832 = vmax.f32 %v1768, 0.0
          %v1833 = vmax.f32 %v1769, 0.0
          %v1834 = vmax.f32 %v1770, 0.0
          %v1835 = vmax.f32 %v1771, 0.0
          %v1836 = vmax.f32 %v1772, 0.0
          %v1837 = vmax.f32 %v1773, 0.0
          %v1838 = vmax.f32 %v1774, 0.0
          %v1839 = vmax.f32 %v1775, 0.0
          %v1840 = vmax.f32 %v1776, 0.0
          %v1841 = vmax.f32 %v1777, 0.0
          %v1842 = vmax.f32 %v1778, 0.0
          %v1843 = vmax.f32 %v1779, 0.0
          %v1844 = vmax.f32 %v1780, 0.0
          %v1845 = vmax.f32 %v1781, 0.0
          %v1846 = vmax.f32 %v1782, 0.0
          %v1847 = vmax.f32 %v1783, 0.0
          %v1848 = vmax.f32 %v1784, 0.0
          %v1849 = vmax.f32 %v1785, 0.0
          %v1850 = vmax.f32 %v1786, 0.0
          %v1851 = vmax.f32 %v1787, 0.0
          %v1852 = vmax.f32 %v1788, 0.0
          %v1853 = vmax.f32 %v1789, 0.0
          %v1854 = vmax.f32 %v1790, 0.0
          %v1855 = vmax.f32 %v1791, 0.0
          %v1856 = vmax.f32 %v1792, 0.0
          %v1857 = vmax.f32 %v1793, 0.0
          %v1858 = vmax.f32 %v1794, 0.0
          %v1859 = vmax.f32 %v1795, 0.0
          %v1860 = vmax.f32 %v1796, 0.0
          %v1861 = vmax.f32 %v1797, 0.0
          %v1862 = vmax.f32 %v1798, 0.0
          %v1863 = vmax.f32 %v1799, 0.0
          %v1864 = vmax.f32 %v1800, 0.0
          %v1865 = vmax.f32 %v1801, 0.0
          %v1866 = vmax.f32 %v1802, 0.0
          %v1867 = vmax.f32 %v1803, 0.0
          %v1868 = vld [vmem:[#allocation11] sm:$0xff]
          %v1869 = vld [vmem:[#allocation11 + $0x8] sm:$0xff]
          %v1870 = vld [vmem:[#allocation11 + $0x10] sm:$0xff]
          %v1871 = vld [vmem:[#allocation11 + $0x18] sm:$0xff]
          %v1872 = vld [vmem:[#allocation11 + $0x20] sm:$0xff]
          %v1873 = vld [vmem:[#allocation11 + $0x28] sm:$0xff]
          %v1874 = vld [vmem:[#allocation11 + $0x30] sm:$0xff]
          %v1875 = vld [vmem:[#allocation11 + $0x38] sm:$0xff]
          %v1876 = vld [vmem:[#allocation11 + $0x40] sm:$0xff]
          %v1877 = vld [vmem:[#allocation11 + $0x48] sm:$0xff]
          %v1878 = vld [vmem:[#allocation11 + $0x50] sm:$0xff]
          %v1879 = vld [vmem:[#allocation11 + $0x58] sm:$0xff]
          %v1880 = vld [vmem:[#allocation11 + $0x60] sm:$0xff]
          %v1881 = vld [vmem:[#allocation11 + $0x68] sm:$0xff]
          %v1882 = vld [vmem:[#allocation11 + $0x70] sm:$0xff]
          %v1883 = vld [vmem:[#allocation11 + $0x78] sm:$0xff]
          %v1884 = vld [vmem:[#allocation11 + $0x80] sm:$0xff]
          %v1885 = vld [vmem:[#allocation11 + $0x88] sm:$0xff]
          %v1886 = vld [vmem:[#allocation11 + $0x90] sm:$0xff]
          %v1887 = vld [vmem:[#allocation11 + $0x98] sm:$0xff]
          %v1888 = vld [vmem:[#allocation11 + $0xa0] sm:$0xff]
          %v1889 = vld [vmem:[#allocation11 + $0xa8] sm:$0xff]
          %v1890 = vld [vmem:[#allocation11 + $0xb0] sm:$0xff]
          %v1891 = vld [vmem:[#allocation11 + $0xb8] sm:$0xff]
          %v1892 = vld [vmem:[#allocation11 + $0xc0] sm:$0xff]
          %v1893 = vld [vmem:[#allocation11 + $0xc8] sm:$0xff]
          %v1894 = vld [vmem:[#allocation11 + $0xd0] sm:$0xff]
          %v1895 = vld [vmem:[#allocation11 + $0xd8] sm:$0xff]
          %v1896 = vld [vmem:[#allocation11 + $0xe0] sm:$0xff]
          %v1897 = vld [vmem:[#allocation11 + $0xe8] sm:$0xff]
          %v1898 = vld [vmem:[#allocation11 + $0xf0] sm:$0xff]
          %v1899 = vld [vmem:[#allocation11 + $0xf8] sm:$0xff]
          %v1900 = vld [vmem:[#allocation11 + $0x100] sm:$0xff]
          %v1901 = vld [vmem:[#allocation11 + $0x108] sm:$0xff]
          %v1902 = vld [vmem:[#allocation11 + $0x110] sm:$0xff]
          %v1903 = vld [vmem:[#allocation11 + $0x118] sm:$0xff]
          %v1904 = vld [vmem:[#allocation11 + $0x120] sm:$0xff]
          %v1905 = vld [vmem:[#allocation11 + $0x128] sm:$0xff]
          %v1906 = vld [vmem:[#allocation11 + $0x130] sm:$0xff]
          %v1907 = vld [vmem:[#allocation11 + $0x138] sm:$0xff]
          %v1908 = vld [vmem:[#allocation11 + $0x140] sm:$0xff]
          %v1909 = vld [vmem:[#allocation11 + $0x148] sm:$0xff]
          %v1910 = vld [vmem:[#allocation11 + $0x150] sm:$0xff]
          %v1911 = vld [vmem:[#allocation11 + $0x158] sm:$0xff]
          %v1912 = vld [vmem:[#allocation11 + $0x160] sm:$0xff]
          %v1913 = vld [vmem:[#allocation11 + $0x168] sm:$0xff]
          %v1914 = vld [vmem:[#allocation11 + $0x170] sm:$0xff]
          %v1915 = vld [vmem:[#allocation11 + $0x178] sm:$0xff]
          %v1916 = vld [vmem:[#allocation11 + $0x180] sm:$0xff]
          %v1917 = vld [vmem:[#allocation11 + $0x188] sm:$0xff]
          %v1918 = vld [vmem:[#allocation11 + $0x190] sm:$0xff]
          %v1919 = vld [vmem:[#allocation11 + $0x198] sm:$0xff]
          %v1920 = vld [vmem:[#allocation11 + $0x1a0] sm:$0xff]
          %v1921 = vld [vmem:[#allocation11 + $0x1a8] sm:$0xff]
          %v1922 = vld [vmem:[#allocation11 + $0x1b0] sm:$0xff]
          %v1923 = vld [vmem:[#allocation11 + $0x1b8] sm:$0xff]
          %v1924 = vld [vmem:[#allocation11 + $0x1c0] sm:$0xff]
          %v1925 = vld [vmem:[#allocation11 + $0x1c8] sm:$0xff]
          %v1926 = vld [vmem:[#allocation11 + $0x1d0] sm:$0xff]
          %v1927 = vld [vmem:[#allocation11 + $0x1d8] sm:$0xff]
          %v1928 = vld [vmem:[#allocation11 + $0x1e0] sm:$0xff]
          %v1929 = vld [vmem:[#allocation11 + $0x1e8] sm:$0xff]
          %v1930 = vld [vmem:[#allocation11 + $0x1f0] sm:$0xff]
          %v1931 = vld [vmem:[#allocation11 + $0x1f8] sm:$0xff]
          %v1932 = vld [vmem:[%s5] sm:$0x1]
          %v1934 = vlaneseq
          %v1935 = vshrl.u32 %v1934, 7
          %v1936 = vsub.s32 0, %v1935
          %v1937 = vrot.slane %v1932, %v1936
          %1939 = vmatprep.subr.mxu0 0.0
          %1940 = vmatpush1.msra.mxu0 %v1868
          %1941 = vmatprep.subr.mxu0 0.0
          %1942 = vmatpush1.msra.mxu0 %v1869
          %1943 = vmatprep.subr.mxu0 0.0
          %1944 = vmatpush1.msra.mxu0 %v1870
          %1945 = vmatprep.subr.mxu0 0.0
          %1946 = vmatpush1.msra.mxu0 %v1871
          %1947 = vmatprep.subr.mxu0 0.0
          %1948 = vmatpush1.msra.mxu0 %v1872
          %1949 = vmatprep.subr.mxu0 0.0
          %1950 = vmatpush1.msra.mxu0 %v1873
          %1951 = vmatprep.subr.mxu0 0.0
          %1952 = vmatpush1.msra.mxu0 %v1874
          %1953 = vmatprep.subr.mxu0 0.0
          %1954 = vmatpush1.msra.mxu0 %v1875
          %1955 = vmatprep.subr.mxu0 0.0
          %1956 = vmatpush1.msra.mxu0 %v1876
          %1957 = vmatprep.subr.mxu0 0.0
          %1958 = vmatpush1.msra.mxu0 %v1877
          %1959 = vmatprep.subr.mxu0 0.0
          %1960 = vmatpush1.msra.mxu0 %v1878
          %1961 = vmatprep.subr.mxu0 0.0
          %1962 = vmatpush1.msra.mxu0 %v1879
          %1963 = vmatprep.subr.mxu0 0.0
          %1964 = vmatpush1.msra.mxu0 %v1880
          %1965 = vmatprep.subr.mxu0 0.0
          %1966 = vmatpush1.msra.mxu0 %v1881
          %1967 = vmatprep.subr.mxu0 0.0
          %1968 = vmatpush1.msra.mxu0 %v1882
          %1969 = vmatprep.subr.mxu0 0.0
          %1970 = vmatpush1.msra.mxu0 %v1883
          %1971 = vmatprep.subr.mxu0 0.0
          %1972 = vmatpush1.msra.mxu0 %v1884
          %1973 = vmatprep.subr.mxu0 0.0
          %1974 = vmatpush1.msra.mxu0 %v1885
          %1975 = vmatprep.subr.mxu0 0.0
          %1976 = vmatpush1.msra.mxu0 %v1886
          %1977 = vmatprep.subr.mxu0 0.0
          %1978 = vmatpush1.msra.mxu0 %v1887
          %1979 = vmatprep.subr.mxu0 0.0
          %1980 = vmatpush1.msra.mxu0 %v1888
          %1981 = vmatprep.subr.mxu0 0.0
          %1982 = vmatpush1.msra.mxu0 %v1889
          %1983 = vmatprep.subr.mxu0 0.0
          %1984 = vmatpush1.msra.mxu0 %v1890
          %1985 = vmatprep.subr.mxu0 0.0
          %1986 = vmatpush1.msra.mxu0 %v1891
          %1987 = vmatprep.subr.mxu0 0.0
          %1988 = vmatpush1.msra.mxu0 %v1892
          %1989 = vmatprep.subr.mxu0 0.0
          %1990 = vmatpush1.msra.mxu0 %v1893
          %1991 = vmatprep.subr.mxu0 0.0
          %1992 = vmatpush1.msra.mxu0 %v1894
          %1993 = vmatprep.subr.mxu0 0.0
          %1994 = vmatpush1.msra.mxu0 %v1895
          %1995 = vmatprep.subr.mxu0 0.0
          %1996 = vmatpush1.msra.mxu0 %v1896
          %1997 = vmatprep.subr.mxu0 0.0
          %1998 = vmatpush1.msra.mxu0 %v1897
          %1999 = vmatprep.subr.mxu0 0.0
          %2000 = vmatpush1.msra.mxu0 %v1898
          %2001 = vmatprep.subr.mxu0 0.0
          %2002 = vmatpush1.msra.mxu0 %v1899
          %2003 = vmatprep.mubr.f32.mxu0 %v1805
          %2004 = vmatmul.mubr.f32.gmra.mrb[0].mxu0 %v1804
          %v2005 = vpop.f32.mrb[0].mxu0
          %v2006 = vadd.f32 %v1937, %v2005
          %v2007 = vpop.f32.mrb[0].mxu0
          %2008 = vmatprep.mubr.f32.mxu0 %v1809
          %2009 = vmatmul.mubr.f32.gmra.mrb[0].mxu0 %v1808
          %v2010 = vpop.f32.mrb[0].mxu0
          %v2011 = vadd.f32 %v1937, %v2010
          %v2012 = vpop.f32.mrb[0].mxu0
          %2013 = vmatprep.mubr.f32.mxu0 %v1813
          %2014 = vmatmul.mubr.f32.gmra.mrb[0].mxu0 %v1812
          %v2015 = vpop.f32.mrb[0].mxu0
          %v2016 = vadd.f32 %v1937, %v2015
          %v2017 = vpop.f32.mrb[0].mxu0
          %2018 = vmatprep.mubr.f32.mxu0 %v1817
          %2019 = vmatmul.mubr.f32.gmra.mrb[0].mxu0 %v1816
          %v2020 = vpop.f32.mrb[0].mxu0
          %v2021 = vadd.f32 %v1937, %v2020
          %v2022 = vpop.f32.mrb[0].mxu0
          %2023 = vmatprep.mubr.f32.mxu0 %v1821
          %2024 = vmatmul.mubr.f32.gmra.mrb[0].mxu0 %v1820
          %v2025 = vpop.f32.mrb[0].mxu0
          %v2026 = vadd.f32 %v1937, %v2025
          %v2027 = vpop.f32.mrb[0].mxu0
          %2028 = vmatprep.mubr.f32.mxu0 %v1825
          %2029 = vmatmul.mubr.f32.gmra.mrb[0].mxu0 %v1824
          %v2030 = vpop.f32.mrb[0].mxu0
          %v2031 = vadd.f32 %v1937, %v2030
          %v2032 = vpop.f32.mrb[0].mxu0
          %2033 = vmatprep.mubr.f32.mxu0 %v1829
          %2034 = vmatmul.mubr.f32.gmra.mrb[0].mxu0 %v1828
          %v2035 = vpop.f32.mrb[0].mxu0
          %v2036 = vadd.f32 %v1937, %v2035
          %v2037 = vpop.f32.mrb[0].mxu0
          %2038 = vmatprep.mubr.f32.mxu0 %v1833
          %2039 = vmatmul.mubr.f32.gmra.mrb[0].mxu0 %v1832
          %v2040 = vpop.f32.mrb[0].mxu0
          %v2041 = vadd.f32 %v1937, %v2040
          %v2042 = vpop.f32.mrb[0].mxu0
          %2043 = vmatprep.mubr.f32.mxu0 %v1837
          %2044 = vmatmul.mubr.f32.gmra.mrb[0].mxu0 %v1836
          %v2045 = vpop.f32.mrb[0].mxu0
          %v2046 = vadd.f32 %v1937, %v2045
          %v2047 = vpop.f32.mrb[0].mxu0
          %2048 = vmatprep.mubr.f32.mxu0 %v1841
          %2049 = vmatmul.mubr.f32.gmra.mrb[0].mxu0 %v1840
          %v2050 = vpop.f32.mrb[0].mxu0
          %v2051 = vadd.f32 %v1937, %v2050
          %v2052 = vpop.f32.mrb[0].mxu0
          %2053 = vmatprep.mubr.f32.mxu0 %v1845
          %2054 = vmatmul.mubr.f32.gmra.mrb[0].mxu0 %v1844
          %v2055 = vpop.f32.mrb[0].mxu0
          %v2056 = vadd.f32 %v1937, %v2055
          %v2057 = vpop.f32.mrb[0].mxu0
          %2058 = vmatprep.mubr.f32.mxu0 %v1849
          %2059 = vmatmul.mubr.f32.gmra.mrb[0].mxu0 %v1848
          %v2060 = vpop.f32.mrb[0].mxu0
          %v2061 = vadd.f32 %v1937, %v2060
          %v2062 = vpop.f32.mrb[0].mxu0
          %2063 = vmatprep.mubr.f32.mxu0 %v1853
          %2064 = vmatmul.mubr.f32.gmra.mrb[0].mxu0 %v1852
          %v2065 = vpop.f32.mrb[0].mxu0
          %v2066 = vadd.f32 %v1937, %v2065
          %v2067 = vpop.f32.mrb[0].mxu0
          %2068 = vmatprep.mubr.f32.mxu0 %v1857
          %2069 = vmatmul.mubr.f32.gmra.mrb[0].mxu0 %v1856
          %v2070 = vpop.f32.mrb[0].mxu0
          %v2071 = vadd.f32 %v1937, %v2070
          %v2072 = vpop.f32.mrb[0].mxu0
          %2073 = vmatprep.mubr.f32.mxu0 %v1861
          %2074 = vmatmul.mubr.f32.gmra.mrb[0].mxu0 %v1860
          %v2075 = vpop.f32.mrb[0].mxu0
          %v2076 = vadd.f32 %v1937, %v2075
          %v2077 = vpop.f32.mrb[0].mxu0
          %2078 = vmatprep.mubr.f32.mxu0 %v1865
          %2079 = vmatmul.mubr.f32.gmra.mrb[0].mxu0 %v1864
          %v2080 = vpop.f32.mrb[0].mxu0
          %v2081 = vadd.f32 %v1937, %v2080
          %v2082 = vpop.f32.mrb[0].mxu0
          %2083 = vdwg.mxu0
          %2084 = vmatprep.subr.mxu0 0.0
          %2085 = vmatpush1.msra.mxu0 %v1900
          %2086 = vmatprep.subr.mxu0 0.0
          %2087 = vmatpush1.msra.mxu0 %v1901
          %2088 = vmatprep.subr.mxu0 0.0
          %2089 = vmatpush1.msra.mxu0 %v1902
          %2090 = vmatprep.subr.mxu0 0.0
          %2091 = vmatpush1.msra.mxu0 %v1903
          %2092 = vmatprep.subr.mxu0 0.0
          %2093 = vmatpush1.msra.mxu0 %v1904
          %2094 = vmatprep.subr.mxu0 0.0
          %2095 = vmatpush1.msra.mxu0 %v1905
          %2096 = vmatprep.subr.mxu0 0.0
          %2097 = vmatpush1.msra.mxu0 %v1906
          %2098 = vmatprep.subr.mxu0 0.0
          %2099 = vmatpush1.msra.mxu0 %v1907
          %2100 = vmatprep.subr.mxu0 0.0
          %2101 = vmatpush1.msra.mxu0 %v1908
          %2102 = vmatprep.subr.mxu0 0.0
          %2103 = vmatpush1.msra.mxu0 %v1909
          %2104 = vmatprep.subr.mxu0 0.0
          %2105 = vmatpush1.msra.mxu0 %v1910
          %2106 = vmatprep.subr.mxu0 0.0
          %2107 = vmatpush1.msra.mxu0 %v1911
          %2108 = vmatprep.subr.mxu0 0.0
          %2109 = vmatpush1.msra.mxu0 %v1912
          %2110 = vmatprep.subr.mxu0 0.0
          %2111 = vmatpush1.msra.mxu0 %v1913
          %2112 = vmatprep.subr.mxu0 0.0
          %2113 = vmatpush1.msra.mxu0 %v1914
          %2114 = vmatprep.subr.mxu0 0.0
          %2115 = vmatpush1.msra.mxu0 %v1915
          %2116 = vmatprep.subr.mxu0 0.0
          %2117 = vmatpush1.msra.mxu0 %v1916
          %2118 = vmatprep.subr.mxu0 0.0
          %2119 = vmatpush1.msra.mxu0 %v1917
          %2120 = vmatprep.subr.mxu0 0.0
          %2121 = vmatpush1.msra.mxu0 %v1918
          %2122 = vmatprep.subr.mxu0 0.0
          %2123 = vmatpush1.msra.mxu0 %v1919
          %2124 = vmatprep.subr.mxu0 0.0
          %2125 = vmatpush1.msra.mxu0 %v1920
          %2126 = vmatprep.subr.mxu0 0.0
          %2127 = vmatpush1.msra.mxu0 %v1921
          %2128 = vmatprep.subr.mxu0 0.0
          %2129 = vmatpush1.msra.mxu0 %v1922
          %2130 = vmatprep.subr.mxu0 0.0
          %2131 = vmatpush1.msra.mxu0 %v1923
          %2132 = vmatprep.subr.mxu0 0.0
          %2133 = vmatpush1.msra.mxu0 %v1924
          %2134 = vmatprep.subr.mxu0 0.0
          %2135 = vmatpush1.msra.mxu0 %v1925
          %2136 = vmatprep.subr.mxu0 0.0
          %2137 = vmatpush1.msra.mxu0 %v1926
          %2138 = vmatprep.subr.mxu0 0.0
          %2139 = vmatpush1.msra.mxu0 %v1927
          %2140 = vmatprep.subr.mxu0 0.0
          %2141 = vmatpush1.msra.mxu0 %v1928
          %2142 = vmatprep.subr.mxu0 0.0
          %2143 = vmatpush1.msra.mxu0 %v1929
          %2144 = vmatprep.subr.mxu0 0.0
          %2145 = vmatpush1.msra.mxu0 %v1930
          %2146 = vmatprep.subr.mxu0 0.0
          %2147 = vmatpush1.msra.mxu0 %v1931
          %2148 = vmatprep.mubr.f32.mxu0 %v1807
          %2149 = vmatmul.mubr.f32.gmra.mrb[0].mxu0 %v1806
          %v2150 = vpop.f32.mrb[0].mxu0
          %v2151 = vadd.f32 %v2006, %v2150
          %v2152 = vpop.f32.mrb[0].mxu0
          %2153 = vmatprep.mubr.f32.mxu0 %v1811
          %2154 = vmatmul.mubr.f32.gmra.mrb[0].mxu0 %v1810
          %v2155 = vpop.f32.mrb[0].mxu0
          %v2156 = vadd.f32 %v2011, %v2155
          %v2157 = vpop.f32.mrb[0].mxu0
          %2158 = vmatprep.mubr.f32.mxu0 %v1815
          %2159 = vmatmul.mubr.f32.gmra.mrb[0].mxu0 %v1814
          %v2160 = vpop.f32.mrb[0].mxu0
          %v2161 = vadd.f32 %v2016, %v2160
          %v2162 = vpop.f32.mrb[0].mxu0
          %2163 = vmatprep.mubr.f32.mxu0 %v1819
          %2164 = vmatmul.mubr.f32.gmra.mrb[0].mxu0 %v1818
          %v2165 = vpop.f32.mrb[0].mxu0
          %v2166 = vadd.f32 %v2021, %v2165
          %v2167 = vpop.f32.mrb[0].mxu0
          %2168 = vmatprep.mubr.f32.mxu0 %v1823
          %2169 = vmatmul.mubr.f32.gmra.mrb[0].mxu0 %v1822
          %v2170 = vpop.f32.mrb[0].mxu0
          %v2171 = vadd.f32 %v2026, %v2170
          %v2172 = vpop.f32.mrb[0].mxu0
          %2173 = vmatprep.mubr.f32.mxu0 %v1827
          %2174 = vmatmul.mubr.f32.gmra.mrb[0].mxu0 %v1826
          %v2175 = vpop.f32.mrb[0].mxu0
          %v2176 = vadd.f32 %v2031, %v2175
          %v2177 = vpop.f32.mrb[0].mxu0
          %2178 = vmatprep.mubr.f32.mxu0 %v1831
          %2179 = vmatmul.mubr.f32.gmra.mrb[0].mxu0 %v1830
          %v2180 = vpop.f32.mrb[0].mxu0
          %v2181 = vadd.f32 %v2036, %v2180
          %v2182 = vpop.f32.mrb[0].mxu0
          %2183 = vmatprep.mubr.f32.mxu0 %v1835
          %2184 = vmatmul.mubr.f32.gmra.mrb[0].mxu0 %v1834
          %v2185 = vpop.f32.mrb[0].mxu0
          %v2186 = vadd.f32 %v2041, %v2185
          %v2187 = vpop.f32.mrb[0].mxu0
          %2188 = vmatprep.mubr.f32.mxu0 %v1839
          %2189 = vmatmul.mubr.f32.gmra.mrb[0].mxu0 %v1838
          %v2190 = vpop.f32.mrb[0].mxu0
          %v2191 = vadd.f32 %v2046, %v2190
          %v2192 = vpop.f32.mrb[0].mxu0
          %2193 = vmatprep.mubr.f32.mxu0 %v1843
          %2194 = vmatmul.mubr.f32.gmra.mrb[0].mxu0 %v1842
          %v2195 = vpop.f32.mrb[0].mxu0
          %v2196 = vadd.f32 %v2051, %v2195
          %v2197 = vpop.f32.mrb[0].mxu0
          %2198 = vmatprep.mubr.f32.mxu0 %v1847
          %2199 = vmatmul.mubr.f32.gmra.mrb[0].mxu0 %v1846
          %v2200 = vpop.f32.mrb[0].mxu0
          %v2201 = vadd.f32 %v2056, %v2200
          %v2202 = vpop.f32.mrb[0].mxu0
          %2203 = vmatprep.mubr.f32.mxu0 %v1851
          %2204 = vmatmul.mubr.f32.gmra.mrb[0].mxu0 %v1850
          %v2205 = vpop.f32.mrb[0].mxu0
          %v2206 = vadd.f32 %v2061, %v2205
          %v2207 = vpop.f32.mrb[0].mxu0
          %2208 = vmatprep.mubr.f32.mxu0 %v1855
          %2209 = vmatmul.mubr.f32.gmra.mrb[0].mxu0 %v1854
          %v2210 = vpop.f32.mrb[0].mxu0
          %v2211 = vadd.f32 %v2066, %v2210
          %v2212 = vpop.f32.mrb[0].mxu0
          %2213 = vmatprep.mubr.f32.mxu0 %v1859
          %2214 = vmatmul.mubr.f32.gmra.mrb[0].mxu0 %v1858
          %v2215 = vpop.f32.mrb[0].mxu0
          %v2216 = vadd.f32 %v2071, %v2215
          %v2217 = vpop.f32.mrb[0].mxu0
          %2218 = vmatprep.mubr.f32.mxu0 %v1863
          %2219 = vmatmul.mubr.f32.gmra.mrb[0].mxu0 %v1862
          %v2220 = vpop.f32.mrb[0].mxu0
          %v2221 = vadd.f32 %v2076, %v2220
          %v2222 = vpop.f32.mrb[0].mxu0
          %2223 = vmatprep.mubr.f32.mxu0 %v1867
          %2224 = vmatmul.mubr.f32.gmra.mrb[0].mxu0 %v1866
          %v2225 = vpop.f32.mrb[0].mxu0
          %v2226 = vadd.f32 %v2081, %v2225
          %v2227 = vpop.f32.mrb[0].mxu0
          %2228 = vdwg.mxu0
          %2229 = vst [vmem:[%s311] sm:$0xff] %v2151
          %2230 = vst [vmem:[%s311 + $0x8] sm:$0xff] %v2156
          %2231 = vst [vmem:[%s311 + $0x10] sm:$0xff] %v2161
          %2232 = vst [vmem:[%s311 + $0x18] sm:$0xff] %v2166
          %2233 = vst [vmem:[%s311 + $0x20] sm:$0xff] %v2171
          %2234 = vst [vmem:[%s311 + $0x28] sm:$0xff] %v2176
          %2235 = vst [vmem:[%s311 + $0x30] sm:$0xff] %v2181
          %2236 = vst [vmem:[%s311 + $0x38] sm:$0xff] %v2186
          %2237 = vst [vmem:[%s311 + $0x40] sm:$0xff] %v2191
          %2238 = vst [vmem:[%s311 + $0x48] sm:$0xff] %v2196
          %2239 = vst [vmem:[%s311 + $0x50] sm:$0xff] %v2201
          %2240 = vst [vmem:[%s311 + $0x58] sm:$0xff] %v2206
          %2241 = vst [vmem:[%s311 + $0x60] sm:$0xff] %v2211
          %2242 = vst [vmem:[%s311 + $0x68] sm:$0xff] %v2216
          %2243 = vst [vmem:[%s311 + $0x70] sm:$0xff] %v2221
          %2244 = vst [vmem:[%s311 + $0x78] sm:$0xff] %v2226
        $region72: #{tpu_custom_call.1} parent=43 // pred_fallthru
          _
        %s2245 = sand.u32 %s175, 1
        %s2246 = scalar_lea.sflag [#allocation8], %s2245
        %s2247 = sand.u32 %s175, 1
        %s2248 = smul.addr %s2247, 128
        %s2249 = scalar_lea.vmem [#allocation12], %s2248
        // Predicated region
        $region73: #{tpu_custom_call.1} parent=43 // pred_check
          %p2250 = pneg %p185
        $region74: #{tpu_custom_call.1} parent=43 // pred_check_branch
          %2252 = sbr.rel (%p2250) target = $region76
        $region75: #{tpu_custom_call.1} parent=43 // pred_region
          %s2253 = smul.u32 16, %s29
          %s2255 = ssub.s32 2048, 2048
          %2256 = vsyncadd %s2246, %s2255
          %s2257 = smul.addr %s2253, 128
          %s2258 = scalar_lea.hbm %s6, %s2257
          %s2259 = sshll.u32 %s2249, 4
          %s2260 = int_to_ptr.vmem [resolvable:$true] %s2259
          %2265 = dma.vmem_to_hbm [thread:$0]  %s2260, 2048, %s2258, %s2246, 128, 128, 8
        $region76: #{tpu_custom_call.1} parent=43 // pred_fallthru
          _
      $region44: #{tpu_custom_call.1} parent=5 // pred_fallthru
        _
      %p2266 = scmp.le.s32.totalorder 2, %s19
      // Predicated region
      $region77: #{tpu_custom_call.1} parent=5 // pred_check
        %p2267 = pneg %p2266
      $region78: #{tpu_custom_call.1} parent=5 // pred_check_branch
        %2269 = sbr.rel (%p2267) target = $region80
      $region79: #{tpu_custom_call.1} parent=5 // pred_region
        %s2270 = ssub.s32 %s19, 2
        // Predicated region
        $region81: #{tpu_custom_call.1} parent=79 // pred_check
          %p2271 = pneg %p191
        $region82: #{tpu_custom_call.1} parent=79 // pred_check_branch
          %2273 = sbr.rel (%p2271) target = $region84
        $region83: #{tpu_custom_call.1} parent=79 // pred_region
          %s2274 = sand.u32 %s176, 1
          %s2275 = scalar_lea.sflag [#allocation8], %s2274
          %s2276 = sand.u32 %s176, 1
          %s2277 = smul.addr %s2276, 128
          %s2278 = scalar_lea.vmem [#allocation12], %s2277
          %2279 = dma.done %s2275, 2048
        $region84: #{tpu_custom_call.1} parent=79 // pred_fallthru
          _
      $region80: #{tpu_custom_call.1} parent=5 // pred_fallthru
        _
    $region6: #{tpu_custom_call.1} parent=1 // loop_footer
      %s23 = sadd.s32 1, %s19
    $region7: #{tpu_custom_call.1} parent=1 // loop_footer_branch
      %18 = sbr.rel target = $region3
    $region8: #{tpu_custom_call.1} parent=1 // loop_exit
      _
    %2280 = vsyncpa [#allocation7], 1
    %s2281 = scalar_lea.sflag [#allocation7], 1
    %2282 = vsyncpa %s2281, 1
    %2283 = vsyncpa [#allocation10], 1
    %2284 = vsyncpa [#allocation8], 1
    %s2285 = scalar_lea.sflag [#allocation8], 1
    %2286 = vsyncpa %s2285, 1

</llo_original>
